<compile_context>
chip_gen: v5e
topology: v5e:2x2
jax: 0.10.0
libtpu: 0.0.40
codegen_flags: <defaults>
</compile_context>

<pallas_src>
import numpy as np
import jax
import jax.numpy as jnp
from jax.experimental import pallas as pl
from jax.experimental.pallas import tpu as pltpu

T_FIXED = 10          # self.T = 10 in the PyTorch module
LN_EPS = 1e-5         # nn.LayerNorm default eps

# MXU input dtype.  f32 keeps the correctness self-check tight; flip to
# jnp.bfloat16 on v6e/v7x at production sizes (~2x MXU rate, half the weight
# bytes).  Accumulation and the LayerNorm/ReLU epilogue stay f32 either way.
DOT_DTYPE = jnp.float32


# ---------------------------------------------------------------------------
# Bilinear time-upsample (nn.Upsample(size=(10,1), mode='bilinear',
# align_corners=False) along time) baked as static two-tap (i0, i1, w) per step.
# ---------------------------------------------------------------------------
def bilinear_upsample_taps(l_in, l_out):
    """out[t] = (1-w)*in[i0] + w*in[i1], align_corners=False convention."""
    taps = []
    scale = l_in / l_out
    for t in range(l_out):
        src = max((t + 0.5) * scale - 0.5, 0.0)
        i0 = min(int(np.floor(src)), l_in - 1)
        i1 = i0 + 1 if i0 < l_in - 1 else i0
        w = float(src - i0)
        taps.append((i0, i1, w))
    return tuple(taps)


def taps_to_matrix(taps, l_in):
    """[T_out, L_in] interpolation matrix (used only by the pure-JAX reference)."""
    a = np.zeros((len(taps), l_in), dtype=np.float32)
    for t, (i0, i1, w) in enumerate(taps):
        a[t, i0] += 1.0 - w
        a[t, i1] += w
    return jnp.asarray(a)


# ---------------------------------------------------------------------------
# Parameters of one fusion module (NC cell ops + Linear/LayerNorm/ReLU layer)
# ---------------------------------------------------------------------------
def init_module_params(key, D, NC, T):
    kw, kb, kfw, kfb = jax.random.split(key, 4)
    s = 1.0 / np.sqrt(2 * D)
    wc = jax.random.uniform(kw, (NC, 2 * D, D), jnp.float32, -s, s)   # concat(x,y) weight
    bc = jax.random.uniform(kb, (NC, 1, D), jnp.float32, -s, s)
    sf = 1.0 / np.sqrt(NC * D)
    flw = jax.random.uniform(kfw, (NC * D, D), jnp.float32, -sf, sf)  # fusion Linear
    flb = jax.random.uniform(kfb, (1, D), jnp.float32, -sf, sf)
    g = jnp.ones((T, D), jnp.float32)                                 # LayerNorm weight
    be = jnp.zeros((T, D), jnp.float32)                               # LayerNorm bias
    return {"wc": wc, "bc": bc, "flw": flw, "flb": flb, "g": g, "be": be}


# ---------------------------------------------------------------------------
# The single fused kernel: amt + vmt + avmt, one batch tile per grid step
# ---------------------------------------------------------------------------
def _make_fused_kernel(cfg):
    S = cfg["num_scale"]
    NC = cfg["num_cells"]
    BT = cfg["b_tile"]
    T = cfg["T"]
    D = cfg["D"]
    edges_a = cfg["edges_a"]
    edges_v = cfg["edges_v"]
    edges_m = cfg["edges_m"]
    poses = cfg["poses"]
    wins = cfg["wins"]
    taps = cfg["taps"]          # per-cell tuple of T (i0, i1, w) taps
    M = BT * T

    def relu(v):
        return jnp.maximum(v, 0.0)

    def mm(a, b):
        # [M, K] @ [K, N] on the MXU, f32 accumulation.
        return jnp.dot(a, b, preferred_element_type=jnp.float32)

    def layer_norm_relu(h, g, be):
        # h: [M, D] f32 -> LayerNorm over (T, D) per batch element, then ReLU.
        h3 = h.reshape(BT, T, D)
        mu = jnp.mean(h3, axis=(1, 2), keepdims=True)
        var = jnp.mean(jnp.square(h3 - mu), axis=(1, 2), keepdims=True)  # two-pass
        hn = (h3 - mu) * jax.lax.rsqrt(var + LN_EPS)
        return relu(hn * g[None] + be[None])                             # [BT, T, D]

    def kernel(*refs):
        it = iter(refs)
        aud_refs = [next(it) for _ in range(S)]      # [BT, T, D] feature refs
        vid_refs = [next(it) for _ in range(S)]

        def take_params():
            return tuple(next(it) for _ in range(6))  # wc, bc, flw, flb, g, be

        p_amt = take_params()
        p_vmt = take_params()
        p_avmt = take_params()
        a_out_ref = next(it)
        v_out_ref = next(it)
        z_out_ref = next(it)

        # Load each input feature ONCE; keep the [BT, T, D] view (windowed ops)
        # and the flattened [M, D] view (all MXU work). Cast hoisted to one place.
        def load_feat(r):
            v3 = r[...].astype(DOT_DTYPE)
            return v3, v3.reshape(M, D)

        aud_vals = [load_feat(r) for r in aud_refs]
        vid_vals = [load_feat(r) for r in vid_refs]

        # ---- single-modal module: cells + one fusion dot + LayerNorm + ReLU ----
        def single_modal(feats2d, params, edges, out_ref):
            wc_ref, bc_ref, flw_ref, flb_ref, g_ref, be_ref = params
            stage = list(feats2d)                    # [M, D] DOT_DTYPE values
            cells = []
            for i in range(NC):
                ix, iy = edges[i]
                xy = jnp.concatenate([stage[ix], stage[iy]], axis=-1)   # [M, 2D]
                z = relu(mm(xy, wc_ref[i]) + bc_ref[i])                 # f32 [M, D]
                zd = z.astype(DOT_DTYPE)
                stage.append(zd)
                cells.append(zd)
            # fusion Linear as ONE [M, NC*D] @ [NC*D, D] dot (lane concat -> XLU)
            h = mm(jnp.concatenate(cells, axis=-1), flw_ref[...]) + flb_ref[...]
            out = layer_norm_relu(h, g_ref[...], be_ref[...])
            out_ref[...] = out.astype(out_ref.dtype)                    # one store

        # ---- multi-modal module: global op + windowed op + time upsample -------
        def multi_modal(a_vals, v_vals, params, out_ref):
            wc_ref, bc_ref, flw_ref, flb_ref, g_ref, be_ref = params
            a_stage = list(a_vals)                   # (3-D, 2-D) value pairs
            v_stage = list(v_vals)
            cells = []
            for i in range(NC):
                ix, iy = edges_m[i]
                x3, x2 = a_stage[ix]
                y3, y2 = v_stage[iy]
                w_i = wc_ref[i]                      # [2D, D]
                b_i = bc_ref[i]                      # [1, D]
                # global op on the flattened sequences: one [M, 2D] @ [2D, D] dot
                zg = relu(mm(jnp.concatenate([x2, y2], axis=-1), w_i) + b_i)
                # local op on the (px, py, m) windows: static slices of live values
                px, py = poses[i]
                m = wins[i]
                xw = x3[:, px - m:px + m + 1, :]     # [BT, 2m+1, D]
                yw = y3[:, py - m:py + m + 1, :]
                xyw = jnp.concatenate([xw, yw], axis=-1)
                zl = relu(jnp.einsum("blk,kd->bld", xyw, w_i,
                                     preferred_element_type=jnp.float32)
                          + b_i[None])               # [BT, 2m+1, D] f32
                # bilinear (2m+1)->T upsample: static two-tap blend (VPU, no MXU)
                rows = []
                for (i0, i1, w) in taps[i]:
                    if i1 == i0 or w == 0.0:
                        rows.append(zl[:, i0, :])
                    else:
                        rows.append((1.0 - w) * zl[:, i0, :] + w * zl[:, i1, :])
                zm = jnp.stack(rows, axis=1)         # [BT, T, D]
                z2 = zg + zm.reshape(M, D)           # f32 [M, D]
                zd2 = z2.astype(DOT_DTYPE)
                zd3 = zd2.reshape(BT, T, D)
                a_stage.append((zd3, zd2))
                v_stage.append((zd3, zd2))
                cells.append(zd2)
            h = mm(jnp.concatenate(cells, axis=-1), flw_ref[...]) + flb_ref[...]
            out = layer_norm_relu(h, g_ref[...], be_ref[...])
            out_ref[...] = out.astype(out_ref.dtype)

        single_modal([v2 for (_v3, v2) in aud_vals], p_amt, edges_a, a_out_ref)
        single_modal([v2 for (_v3, v2) in vid_vals], p_vmt, edges_v, v_out_ref)
        multi_modal(aud_vals, vid_vals, p_avmt, z_out_ref)

    return kernel


# ---------------------------------------------------------------------------
# Pure-JAX reference (mirrors the PyTorch module math) for correctness checks
# ---------------------------------------------------------------------------
def _ref_op(x, y, w, b):
    """relu(concat(x, y, -1) @ W + b) — the assumed OPERATIONS fusion op."""
    xy = jnp.concatenate([x, y], axis=-1)
    z = jnp.einsum("blk,kd->bld", xy, w, precision=jax.lax.Precision.HIGHEST)
    return jnp.maximum(z + b[None], 0.0)


def _ref_fusion_layer(cells, p):
    zc = jnp.concatenate(cells, axis=-1)                  # [B, T, NC*D]
    h = jnp.einsum("btk,kd->btd", zc, p["flw"],
                   precision=jax.lax.Precision.HIGHEST) + p["flb"][None]
    mu = h.mean(axis=(1, 2), keepdims=True)
    var = jnp.square(h - mu).mean(axis=(1, 2), keepdims=True)
    hn = (h - mu) / jnp.sqrt(var + LN_EPS)
    return jnp.maximum(hn * p["g"][None] + p["be"][None], 0.0)


def _ref_single_modal(feats, p, edges):
    nc = p["wc"].shape[0]
    stage = list(feats)
    for i in range(nc):
        ix, iy = edges[i]
        stage.append(_ref_op(stage[ix], stage[iy], p["wc"][i], p["bc"][i]))
    return _ref_fusion_layer(stage[-nc:], p), stage[-nc:]


def _ref_multi_modal(aud, vid, p, edges, poses, wins, ups):
    nc = p["wc"].shape[0]
    a_stage, v_stage = list(aud), list(vid)
    for i in range(nc):
        ix, iy = edges[i]
        x, y = a_stage[ix], v_stage[iy]
        zg = _ref_op(x, y, p["wc"][i], p["bc"][i])
        px, py = poses[i]
        m = wins[i]
        zl = _ref_op(x[:, px - m:px + m + 1], y[:, py - m:py + m + 1],
                     p["wc"][i], p["bc"][i])
        zm = jnp.einsum("tl,bld->btd", ups[i], zl,
                        precision=jax.lax.Precision.HIGHEST)
        z = zg + zm
        a_stage.append(z)
        v_stage.append(z)
    return _ref_fusion_layer(a_stage[-nc:], p)


# ---------------------------------------------------------------------------
# Module wrapper
# ---------------------------------------------------------------------------
class Args:
    def __init__(self, hid_dim, num_cells, num_scale):
        self.hid_dim = hid_dim
        self.num_cells = num_cells
        self.num_scale = num_scale


def _choose_b_tile(B):
    """Largest divisor of B not exceeding B//2: gives >=2 'parallel' grid steps
    (v7x has 2 TensorCores) while keeping M = B_TILE*T as large as possible."""
    if B <= 1:
        return max(B, 1)
    for bt in range(B // 2, 0, -1):
        if B % bt == 0:
            return bt
    return 1


def _const_index_map(ndim):
    zeros = (0,) * ndim
    return lambda b: zeros


class FoundMultiModalMultiTemporalModulePallas:
    """Pallas port of FoundMultiModalMultiTemporalModule: one fused pallas_call."""

    def __init__(self, key, args, genotype):
        self.D = args.hid_dim
        self.T = T_FIXED
        self.NC = args.num_cells
        self.S = args.num_scale
        self.geno = genotype
        k1, k2, k3 = jax.random.split(key, 3)
        self.p_amt = init_module_params(k1, self.D, self.NC, self.T)
        self.p_vmt = init_module_params(k2, self.D, self.NC, self.T)
        self.p_avmt = init_module_params(k3, self.D, self.NC, self.T)
        wins = genotype["avmt"]["wins"]
        self.taps = tuple(bilinear_upsample_taps(2 * m + 1, self.T) for m in wins)
        self.ups = [taps_to_matrix(t, 2 * m + 1) for t, m in zip(self.taps, wins)]
        self._calls = {}

    def _get_call(self, B):
        if B in self._calls:
            return self._calls[B]
        b_tile = _choose_b_tile(B)
        grid = (B // b_tile,)
        cfg = dict(num_scale=self.S, num_cells=self.NC, b_tile=b_tile,
                   T=self.T, D=self.D,
                   edges_a=tuple(self.geno["amt"]["edges"]),
                   edges_v=tuple(self.geno["vmt"]["edges"]),
                   edges_m=tuple(self.geno["avmt"]["edges"]),
                   poses=tuple(self.geno["avmt"]["poses"]),
                   wins=tuple(self.geno["avmt"]["wins"]),
                   taps=self.taps)
        kernel = _make_fused_kernel(cfg)

        feat_spec = pl.BlockSpec((b_tile, self.T, self.D), lambda b: (b, 0, 0))

        def param_specs(p):
            # Whole-array blocks with constant index maps: weights stay resident
            # in VMEM across grid steps (no re-DMA).
            return [
                pl.BlockSpec(p["wc"].shape, _const_index_map(3)),
                pl.BlockSpec(p["bc"].shape, _const_index_map(3)),
                pl.BlockSpec(p["flw"].shape, _const_index_map(2)),
                pl.BlockSpec(p["flb"].shape, _const_index_map(2)),
                pl.BlockSpec(p["g"].shape, _const_index_map(2)),
                pl.BlockSpec(p["be"].shape, _const_index_map(2)),
            ]

        in_specs = ([feat_spec] * (2 * self.S)
                    + param_specs(self.p_amt)
                    + param_specs(self.p_vmt)
                    + param_specs(self.p_avmt))
        out_specs = (feat_spec, feat_spec, feat_spec)

        call = pl.pallas_call(
            kernel,
            grid=grid,
            out_shape=tuple(jax.ShapeDtypeStruct((B, self.T, self.D), jnp.float32)
                            for _ in range(3)),
            in_specs=in_specs,
            out_specs=out_specs,
            compiler_params=pltpu.CompilerParams(
                dimension_semantics=("parallel",)),
        )
        self._calls[B] = call
        return call

    def forward(self, aud_feats, vid_feats):
        B = aud_feats[0].shape[0]
        call = self._get_call(B)
        # Each feature is passed exactly once (the flattened view is built in-kernel).
        args = list(aud_feats) + list(vid_feats)
        for p in (self.p_amt, self.p_vmt, self.p_avmt):
            args += [p["wc"].astype(DOT_DTYPE), p["bc"],
                     p["flw"].astype(DOT_DTYPE), p["flb"], p["g"], p["be"]]
        return call(*args)

    def forward_ref(self, aud_feats, vid_feats):
        a_out, _ = _ref_single_modal(aud_feats, self.p_amt, self.geno["amt"]["edges"])
        v_out, _ = _ref_single_modal(vid_feats, self.p_vmt, self.geno["vmt"]["edges"])
        z_out = _ref_multi_modal(aud_feats, vid_feats, self.p_avmt,
                                 self.geno["avmt"]["edges"],
                                 self.geno["avmt"]["poses"],
                                 self.geno["avmt"]["wins"], self.ups)
        return a_out, v_out, z_out


if __name__ == "__main__":
    B, D = 2, 32
    num_scale, num_cells = 3, 2
    args = Args(hid_dim=D, num_cells=num_cells, num_scale=num_scale)

    genotype = {
        "amt": {"edges": [(0, 1), (2, 3)], "ops": [("e0", "concat_fc")] * 2},
        "vmt": {"edges": [(1, 2), (0, 3)], "ops": [("e0", "concat_fc")] * 2},
        "avmt": {"edges": [(0, 1), (2, 3)],
                 "ops": [("e0", "concat_fc")] * 2,
                 "poses": [(4, 5), (3, 6)],
                 "wins": [2, 3]},
    }

    key = jax.random.PRNGKey(0)
    k_mod, k_a, k_v = jax.random.split(key, 3)
    ka = jax.random.split(k_a, num_scale)
    kv = jax.random.split(k_v, num_scale)
    aud_feats = [jax.random.normal(ka[i], (B, T_FIXED, D), jnp.float32)
                 for i in range(num_scale)]
    vid_feats = [jax.random.normal(kv[i], (B, T_FIXED, D), jnp.float32)
                 for i in range(num_scale)]

    model = FoundMultiModalMultiTemporalModulePallas(k_mod, args, genotype)

    a_out, v_out, z_out = model.forward(aud_feats, vid_feats)
    jax.block_until_ready((a_out, v_out, z_out))

    # Cross-check the fused Pallas kernel against the pure-JAX reference.
    a_ref, v_ref, z_ref = model.forward_ref(aud_feats, vid_feats)
    tol = 1e-4 if DOT_DTYPE == jnp.float32 else 5e-2
    assert a_out.shape == (B, T_FIXED, D)
    assert v_out.shape == (B, T_FIXED, D)
    assert z_out.shape == (B, T_FIXED, D)
    assert jnp.allclose(a_out, a_ref, rtol=tol, atol=tol)
    assert jnp.allclose(v_out, v_ref, rtol=tol, atol=tol)
    assert jnp.allclose(z_out, z_ref, rtol=tol, atol=tol)

    print("KERNEL_OK")
</pallas_src>

<mosaic_0001>
module attributes {stable_mosaic.version = 11 : i64} {
  func.func @kernel(%arg0: i32, %arg1: memref<1x10x32xf32, #tpu.memory_space<vmem>>, %arg2: memref<1x10x32xf32, #tpu.memory_space<vmem>>, %arg3: memref<1x10x32xf32, #tpu.memory_space<vmem>>, %arg4: memref<1x10x32xf32, #tpu.memory_space<vmem>>, %arg5: memref<1x10x32xf32, #tpu.memory_space<vmem>>, %arg6: memref<1x10x32xf32, #tpu.memory_space<vmem>>, %arg7: memref<2x64x32xf32, #tpu.memory_space<vmem>>, %arg8: memref<2x1x32xf32, #tpu.memory_space<vmem>>, %arg9: memref<64x32xf32, #tpu.memory_space<vmem>>, %arg10: memref<1x32xf32, #tpu.memory_space<vmem>>, %arg11: memref<10x32xf32, #tpu.memory_space<vmem>>, %arg12: memref<10x32xf32, #tpu.memory_space<vmem>>, %arg13: memref<2x64x32xf32, #tpu.memory_space<vmem>>, %arg14: memref<2x1x32xf32, #tpu.memory_space<vmem>>, %arg15: memref<64x32xf32, #tpu.memory_space<vmem>>, %arg16: memref<1x32xf32, #tpu.memory_space<vmem>>, %arg17: memref<10x32xf32, #tpu.memory_space<vmem>>, %arg18: memref<10x32xf32, #tpu.memory_space<vmem>>, %arg19: memref<2x64x32xf32, #tpu.memory_space<vmem>>, %arg20: memref<2x1x32xf32, #tpu.memory_space<vmem>>, %arg21: memref<64x32xf32, #tpu.memory_space<vmem>>, %arg22: memref<1x32xf32, #tpu.memory_space<vmem>>, %arg23: memref<10x32xf32, #tpu.memory_space<vmem>>, %arg24: memref<10x32xf32, #tpu.memory_space<vmem>>, %arg25: memref<1x10x32xf32, #tpu.memory_space<vmem>>, %arg26: memref<1x10x32xf32, #tpu.memory_space<vmem>>, %arg27: memref<1x10x32xf32, #tpu.memory_space<vmem>>) attributes {dimension_semantics = [#tpu.dimension_semantics<parallel>], iteration_bounds = array<i64: 2>, scalar_prefetch = 0 : i64, scratch_operands = 0 : i64, tpu.core_type = #tpu.core_type<tc>, window_params = [{transform_indices = @transform_0, window_bounds = array<i64: 1, 10, 32>}, {transform_indices = @transform_1, window_bounds = array<i64: 1, 10, 32>}, {transform_indices = @transform_2, window_bounds = array<i64: 1, 10, 32>}, {transform_indices = @transform_3, window_bounds = array<i64: 1, 10, 32>}, {transform_indices = @transform_4, window_bounds = array<i64: 1, 10, 32>}, {transform_indices = @transform_5, window_bounds = array<i64: 1, 10, 32>}, {pipeline_mode = #tpu.pipeline_mode<synchronous>, transform_indices = @transform_6, window_bounds = array<i64: 2, 64, 32>}, {pipeline_mode = #tpu.pipeline_mode<synchronous>, transform_indices = @transform_7, window_bounds = array<i64: 2, 1, 32>}, {pipeline_mode = #tpu.pipeline_mode<synchronous>, transform_indices = @transform_8, window_bounds = array<i64: 64, 32>}, {pipeline_mode = #tpu.pipeline_mode<synchronous>, transform_indices = @transform_9, window_bounds = array<i64: 1, 32>}, {pipeline_mode = #tpu.pipeline_mode<synchronous>, transform_indices = @transform_10, window_bounds = array<i64: 10, 32>}, {pipeline_mode = #tpu.pipeline_mode<synchronous>, transform_indices = @transform_11, window_bounds = array<i64: 10, 32>}, {pipeline_mode = #tpu.pipeline_mode<synchronous>, transform_indices = @transform_12, window_bounds = array<i64: 2, 64, 32>}, {pipeline_mode = #tpu.pipeline_mode<synchronous>, transform_indices = @transform_13, window_bounds = array<i64: 2, 1, 32>}, {pipeline_mode = #tpu.pipeline_mode<synchronous>, transform_indices = @transform_14, window_bounds = array<i64: 64, 32>}, {pipeline_mode = #tpu.pipeline_mode<synchronous>, transform_indices = @transform_15, window_bounds = array<i64: 1, 32>}, {pipeline_mode = #tpu.pipeline_mode<synchronous>, transform_indices = @transform_16, window_bounds = array<i64: 10, 32>}, {pipeline_mode = #tpu.pipeline_mode<synchronous>, transform_indices = @transform_17, window_bounds = array<i64: 10, 32>}, {pipeline_mode = #tpu.pipeline_mode<synchronous>, transform_indices = @transform_18, window_bounds = array<i64: 2, 64, 32>}, {pipeline_mode = #tpu.pipeline_mode<synchronous>, transform_indices = @transform_19, window_bounds = array<i64: 2, 1, 32>}, {pipeline_mode = #tpu.pipeline_mode<synchronous>, transform_indices = @transform_20, window_bounds = array<i64: 64, 32>}, {pipeline_mode = #tpu.pipeline_mode<synchronous>, transform_indices = @transform_21, window_bounds = array<i64: 1, 32>}, {pipeline_mode = #tpu.pipeline_mode<synchronous>, transform_indices = @transform_22, window_bounds = array<i64: 10, 32>}, {pipeline_mode = #tpu.pipeline_mode<synchronous>, transform_indices = @transform_23, window_bounds = array<i64: 10, 32>}, {transform_indices = @transform_24, window_bounds = array<i64: 1, 10, 32>}, {transform_indices = @transform_25, window_bounds = array<i64: 1, 10, 32>}, {transform_indices = @transform_26, window_bounds = array<i64: 1, 10, 32>}]} {
    %c0 = arith.constant 0 : index
    %c0_0 = arith.constant 0 : index
    %c0_1 = arith.constant 0 : index
    %0 = vector.load %arg1[%c0, %c0_0, %c0_1] : memref<1x10x32xf32, #tpu.memory_space<vmem>>, vector<1x10x32xf32>
    %1 = vector.shape_cast %0 : vector<1x10x32xf32> to vector<10x32xf32>
    %c0_2 = arith.constant 0 : index
    %c0_3 = arith.constant 0 : index
    %c0_4 = arith.constant 0 : index
    %2 = vector.load %arg2[%c0_2, %c0_3, %c0_4] : memref<1x10x32xf32, #tpu.memory_space<vmem>>, vector<1x10x32xf32>
    %3 = vector.shape_cast %2 : vector<1x10x32xf32> to vector<10x32xf32>
    %c0_5 = arith.constant 0 : index
    %c0_6 = arith.constant 0 : index
    %c0_7 = arith.constant 0 : index
    %4 = vector.load %arg3[%c0_5, %c0_6, %c0_7] : memref<1x10x32xf32, #tpu.memory_space<vmem>>, vector<1x10x32xf32>
    %5 = vector.shape_cast %4 : vector<1x10x32xf32> to vector<10x32xf32>
    %c0_8 = arith.constant 0 : index
    %c0_9 = arith.constant 0 : index
    %c0_10 = arith.constant 0 : index
    %6 = vector.load %arg4[%c0_8, %c0_9, %c0_10] : memref<1x10x32xf32, #tpu.memory_space<vmem>>, vector<1x10x32xf32>
    %7 = vector.shape_cast %6 : vector<1x10x32xf32> to vector<10x32xf32>
    %c0_11 = arith.constant 0 : index
    %c0_12 = arith.constant 0 : index
    %c0_13 = arith.constant 0 : index
    %8 = vector.load %arg5[%c0_11, %c0_12, %c0_13] : memref<1x10x32xf32, #tpu.memory_space<vmem>>, vector<1x10x32xf32>
    %9 = vector.shape_cast %8 : vector<1x10x32xf32> to vector<10x32xf32>
    %c0_14 = arith.constant 0 : index
    %c0_15 = arith.constant 0 : index
    %c0_16 = arith.constant 0 : index
    %10 = vector.load %arg6[%c0_14, %c0_15, %c0_16] : memref<1x10x32xf32, #tpu.memory_space<vmem>>, vector<1x10x32xf32>
    %11 = vector.shape_cast %10 : vector<1x10x32xf32> to vector<10x32xf32>
    %12 = tpu.concatenate %1, %3 in 1 : vector<10x32xf32>, vector<10x32xf32> -> vector<10x64xf32>
    %c0_17 = arith.constant 0 : index
    %c0_18 = arith.constant 0 : index
    %c0_19 = arith.constant 0 : index
    %13 = vector.load %arg7[%c0_17, %c0_18, %c0_19] : memref<2x64x32xf32, #tpu.memory_space<vmem>>, vector<1x64x32xf32>
    %14 = vector.shape_cast %13 : vector<1x64x32xf32> to vector<64x32xf32>
    %cst = arith.constant dense<0.000000e+00> : vector<10x32xf32>
    %15 = tpu.matmul %12, %14, %cst {dimension_numbers = #tpu.dot_dimension_numbers<[1], [0], [0], [1], [0, 0, 1, 1], [], []>} : vector<10x64xf32>, vector<64x32xf32>, vector<10x32xf32> -> vector<10x32xf32>
    %c0_20 = arith.constant 0 : index
    %c0_21 = arith.constant 0 : index
    %c0_22 = arith.constant 0 : index
    %16 = vector.load %arg8[%c0_20, %c0_21, %c0_22] : memref<2x1x32xf32, #tpu.memory_space<vmem>>, vector<1x1x32xf32>
    %17 = vector.shape_cast %16 : vector<1x1x32xf32> to vector<1x32xf32>
    %18 = vector.broadcast %17 : vector<1x32xf32> to vector<10x32xf32>
    %19 = arith.addf %15, %18 : vector<10x32xf32>
    %cst_23 = arith.constant 0.000000e+00 : f32
    %20 = vector.broadcast %cst_23 : f32 to vector<10x32xf32>
    %21 = arith.maximumf %19, %20 : vector<10x32xf32>
    %22 = tpu.concatenate %5, %21 in 1 : vector<10x32xf32>, vector<10x32xf32> -> vector<10x64xf32>
    %c1 = arith.constant 1 : index
    %c0_24 = arith.constant 0 : index
    %c0_25 = arith.constant 0 : index
    %23 = vector.load %arg7[%c1, %c0_24, %c0_25] : memref<2x64x32xf32, #tpu.memory_space<vmem>>, vector<1x64x32xf32>
    %24 = vector.shape_cast %23 : vector<1x64x32xf32> to vector<64x32xf32>
    %cst_26 = arith.constant dense<0.000000e+00> : vector<10x32xf32>
    %25 = tpu.matmul %22, %24, %cst_26 {dimension_numbers = #tpu.dot_dimension_numbers<[1], [0], [0], [1], [0, 0, 1, 1], [], []>} : vector<10x64xf32>, vector<64x32xf32>, vector<10x32xf32> -> vector<10x32xf32>
    %c1_27 = arith.constant 1 : index
    %c0_28 = arith.constant 0 : index
    %c0_29 = arith.constant 0 : index
    %26 = vector.load %arg8[%c1_27, %c0_28, %c0_29] : memref<2x1x32xf32, #tpu.memory_space<vmem>>, vector<1x1x32xf32>
    %27 = vector.shape_cast %26 : vector<1x1x32xf32> to vector<1x32xf32>
    %28 = vector.broadcast %27 : vector<1x32xf32> to vector<10x32xf32>
    %29 = arith.addf %25, %28 : vector<10x32xf32>
    %cst_30 = arith.constant 0.000000e+00 : f32
    %30 = vector.broadcast %cst_30 : f32 to vector<10x32xf32>
    %31 = arith.maximumf %29, %30 : vector<10x32xf32>
    %32 = tpu.concatenate %21, %31 in 1 : vector<10x32xf32>, vector<10x32xf32> -> vector<10x64xf32>
    %c0_31 = arith.constant 0 : index
    %c0_32 = arith.constant 0 : index
    %33 = vector.load %arg9[%c0_31, %c0_32] : memref<64x32xf32, #tpu.memory_space<vmem>>, vector<64x32xf32>
    %cst_33 = arith.constant dense<0.000000e+00> : vector<10x32xf32>
    %34 = tpu.matmul %32, %33, %cst_33 {dimension_numbers = #tpu.dot_dimension_numbers<[1], [0], [0], [1], [0, 0, 1, 1], [], []>} : vector<10x64xf32>, vector<64x32xf32>, vector<10x32xf32> -> vector<10x32xf32>
    %c0_34 = arith.constant 0 : index
    %c0_35 = arith.constant 0 : index
    %35 = vector.load %arg10[%c0_34, %c0_35] : memref<1x32xf32, #tpu.memory_space<vmem>>, vector<1x32xf32>
    %36 = vector.broadcast %35 : vector<1x32xf32> to vector<10x32xf32>
    %37 = arith.addf %34, %36 : vector<10x32xf32>
    %c0_36 = arith.constant 0 : index
    %c0_37 = arith.constant 0 : index
    %38 = vector.load %arg11[%c0_36, %c0_37] : memref<10x32xf32, #tpu.memory_space<vmem>>, vector<10x32xf32>
    %c0_38 = arith.constant 0 : index
    %c0_39 = arith.constant 0 : index
    %39 = vector.load %arg12[%c0_38, %c0_39] : memref<10x32xf32, #tpu.memory_space<vmem>>, vector<10x32xf32>
    %40 = vector.shape_cast %37 : vector<10x32xf32> to vector<1x10x32xf32>
    %cst_40 = arith.constant dense<0.000000e+00> : vector<1xf32>
    %41 = vector.multi_reduction <add>, %40, %cst_40 [1, 2] : vector<1x10x32xf32> to vector<1xf32>
    %42 = vector.shape_cast %41 : vector<1xf32> to vector<1x1x1xf32>
    %cst_41 = arith.constant 3.200000e+02 : f32
    %43 = vector.broadcast %cst_41 : f32 to vector<1x1x1xf32>
    %44 = arith.divf %42, %43 : vector<1x1x1xf32>
    %45 = vector.broadcast %44 : vector<1x1x1xf32> to vector<1x10x32xf32>
    %46 = arith.subf %40, %45 : vector<1x10x32xf32>
    %47 = arith.mulf %46, %46 : vector<1x10x32xf32>
    %cst_42 = arith.constant dense<0.000000e+00> : vector<1xf32>
    %48 = vector.multi_reduction <add>, %47, %cst_42 [1, 2] : vector<1x10x32xf32> to vector<1xf32>
    %49 = vector.shape_cast %48 : vector<1xf32> to vector<1x1x1xf32>
    %cst_43 = arith.constant 3.200000e+02 : f32
    %50 = vector.broadcast %cst_43 : f32 to vector<1x1x1xf32>
    %51 = arith.divf %49, %50 : vector<1x1x1xf32>
    %52 = vector.broadcast %44 : vector<1x1x1xf32> to vector<1x10x32xf32>
    %53 = arith.subf %40, %52 : vector<1x10x32xf32>
    %cst_44 = arith.constant 9.99999974E-6 : f32
    %54 = vector.broadcast %cst_44 : f32 to vector<1x1x1xf32>
    %55 = arith.addf %51, %54 : vector<1x1x1xf32>
    %56 = math.rsqrt %55 : vector<1x1x1xf32>
    %57 = vector.broadcast %56 : vector<1x1x1xf32> to vector<1x10x32xf32>
    %58 = arith.mulf %53, %57 : vector<1x10x32xf32>
    %59 = vector.shape_cast %38 : vector<10x32xf32> to vector<1x10x32xf32>
    %60 = arith.mulf %58, %59 : vector<1x10x32xf32>
    %61 = vector.shape_cast %39 : vector<10x32xf32> to vector<1x10x32xf32>
    %62 = arith.addf %60, %61 : vector<1x10x32xf32>
    %cst_45 = arith.constant 0.000000e+00 : f32
    %63 = vector.broadcast %cst_45 : f32 to vector<1x10x32xf32>
    %64 = arith.maximumf %62, %63 : vector<1x10x32xf32>
    %c0_46 = arith.constant 0 : index
    %c0_47 = arith.constant 0 : index
    %c0_48 = arith.constant 0 : index
    %65 = vector.load %arg25[%c0_46, %c0_47, %c0_48] : memref<1x10x32xf32, #tpu.memory_space<vmem>>, vector<1x10x32xf32>
    tpu.vector_store %arg25[%c0_46, %c0_47, %c0_48], %64 {strides = array<i32>} : memref<1x10x32xf32, #tpu.memory_space<vmem>>, vector<1x10x32xf32>,
    %66 = tpu.concatenate %9, %11 in 1 : vector<10x32xf32>, vector<10x32xf32> -> vector<10x64xf32>
    %c0_49 = arith.constant 0 : index
    %c0_50 = arith.constant 0 : index
    %c0_51 = arith.constant 0 : index
    %67 = vector.load %arg13[%c0_49, %c0_50, %c0_51] : memref<2x64x32xf32, #tpu.memory_space<vmem>>, vector<1x64x32xf32>
    %68 = vector.shape_cast %67 : vector<1x64x32xf32> to vector<64x32xf32>
    %cst_52 = arith.constant dense<0.000000e+00> : vector<10x32xf32>
    %69 = tpu.matmul %66, %68, %cst_52 {dimension_numbers = #tpu.dot_dimension_numbers<[1], [0], [0], [1], [0, 0, 1, 1], [], []>} : vector<10x64xf32>, vector<64x32xf32>, vector<10x32xf32> -> vector<10x32xf32>
    %c0_53 = arith.constant 0 : index
    %c0_54 = arith.constant 0 : index
    %c0_55 = arith.constant 0 : index
    %70 = vector.load %arg14[%c0_53, %c0_54, %c0_55] : memref<2x1x32xf32, #tpu.memory_space<vmem>>, vector<1x1x32xf32>
    %71 = vector.shape_cast %70 : vector<1x1x32xf32> to vector<1x32xf32>
    %72 = vector.broadcast %71 : vector<1x32xf32> to vector<10x32xf32>
    %73 = arith.addf %69, %72 : vector<10x32xf32>
    %cst_56 = arith.constant 0.000000e+00 : f32
    %74 = vector.broadcast %cst_56 : f32 to vector<10x32xf32>
    %75 = arith.maximumf %73, %74 : vector<10x32xf32>
    %76 = tpu.concatenate %7, %75 in 1 : vector<10x32xf32>, vector<10x32xf32> -> vector<10x64xf32>
    %c1_57 = arith.constant 1 : index
    %c0_58 = arith.constant 0 : index
    %c0_59 = arith.constant 0 : index
    %77 = vector.load %arg13[%c1_57, %c0_58, %c0_59] : memref<2x64x32xf32, #tpu.memory_space<vmem>>, vector<1x64x32xf32>
    %78 = vector.shape_cast %77 : vector<1x64x32xf32> to vector<64x32xf32>
    %cst_60 = arith.constant dense<0.000000e+00> : vector<10x32xf32>
    %79 = tpu.matmul %76, %78, %cst_60 {dimension_numbers = #tpu.dot_dimension_numbers<[1], [0], [0], [1], [0, 0, 1, 1], [], []>} : vector<10x64xf32>, vector<64x32xf32>, vector<10x32xf32> -> vector<10x32xf32>
    %c1_61 = arith.constant 1 : index
    %c0_62 = arith.constant 0 : index
    %c0_63 = arith.constant 0 : index
    %80 = vector.load %arg14[%c1_61, %c0_62, %c0_63] : memref<2x1x32xf32, #tpu.memory_space<vmem>>, vector<1x1x32xf32>
    %81 = vector.shape_cast %80 : vector<1x1x32xf32> to vector<1x32xf32>
    %82 = vector.broadcast %81 : vector<1x32xf32> to vector<10x32xf32>
    %83 = arith.addf %79, %82 : vector<10x32xf32>
    %cst_64 = arith.constant 0.000000e+00 : f32
    %84 = vector.broadcast %cst_64 : f32 to vector<10x32xf32>
    %85 = arith.maximumf %83, %84 : vector<10x32xf32>
    %86 = tpu.concatenate %75, %85 in 1 : vector<10x32xf32>, vector<10x32xf32> -> vector<10x64xf32>
    %c0_65 = arith.constant 0 : index
    %c0_66 = arith.constant 0 : index
    %87 = vector.load %arg15[%c0_65, %c0_66] : memref<64x32xf32, #tpu.memory_space<vmem>>, vector<64x32xf32>
    %cst_67 = arith.constant dense<0.000000e+00> : vector<10x32xf32>
    %88 = tpu.matmul %86, %87, %cst_67 {dimension_numbers = #tpu.dot_dimension_numbers<[1], [0], [0], [1], [0, 0, 1, 1], [], []>} : vector<10x64xf32>, vector<64x32xf32>, vector<10x32xf32> -> vector<10x32xf32>
    %c0_68 = arith.constant 0 : index
    %c0_69 = arith.constant 0 : index
    %89 = vector.load %arg16[%c0_68, %c0_69] : memref<1x32xf32, #tpu.memory_space<vmem>>, vector<1x32xf32>
    %90 = vector.broadcast %89 : vector<1x32xf32> to vector<10x32xf32>
    %91 = arith.addf %88, %90 : vector<10x32xf32>
    %c0_70 = arith.constant 0 : index
    %c0_71 = arith.constant 0 : index
    %92 = vector.load %arg17[%c0_70, %c0_71] : memref<10x32xf32, #tpu.memory_space<vmem>>, vector<10x32xf32>
    %c0_72 = arith.constant 0 : index
    %c0_73 = arith.constant 0 : index
    %93 = vector.load %arg18[%c0_72, %c0_73] : memref<10x32xf32, #tpu.memory_space<vmem>>, vector<10x32xf32>
    %94 = vector.shape_cast %91 : vector<10x32xf32> to vector<1x10x32xf32>
    %cst_74 = arith.constant dense<0.000000e+00> : vector<1xf32>
    %95 = vector.multi_reduction <add>, %94, %cst_74 [1, 2] : vector<1x10x32xf32> to vector<1xf32>
    %96 = vector.shape_cast %95 : vector<1xf32> to vector<1x1x1xf32>
    %cst_75 = arith.constant 3.200000e+02 : f32
    %97 = vector.broadcast %cst_75 : f32 to vector<1x1x1xf32>
    %98 = arith.divf %96, %97 : vector<1x1x1xf32>
    %99 = vector.broadcast %98 : vector<1x1x1xf32> to vector<1x10x32xf32>
    %100 = arith.subf %94, %99 : vector<1x10x32xf32>
    %101 = arith.mulf %100, %100 : vector<1x10x32xf32>
    %cst_76 = arith.constant dense<0.000000e+00> : vector<1xf32>
    %102 = vector.multi_reduction <add>, %101, %cst_76 [1, 2] : vector<1x10x32xf32> to vector<1xf32>
    %103 = vector.shape_cast %102 : vector<1xf32> to vector<1x1x1xf32>
    %cst_77 = arith.constant 3.200000e+02 : f32
    %104 = vector.broadcast %cst_77 : f32 to vector<1x1x1xf32>
    %105 = arith.divf %103, %104 : vector<1x1x1xf32>
    %106 = vector.broadcast %98 : vector<1x1x1xf32> to vector<1x10x32xf32>
    %107 = arith.subf %94, %106 : vector<1x10x32xf32>
    %cst_78 = arith.constant 9.99999974E-6 : f32
    %108 = vector.broadcast %cst_78 : f32 to vector<1x1x1xf32>
    %109 = arith.addf %105, %108 : vector<1x1x1xf32>
    %110 = math.rsqrt %109 : vector<1x1x1xf32>
    %111 = vector.broadcast %110 : vector<1x1x1xf32> to vector<1x10x32xf32>
    %112 = arith.mulf %107, %111 : vector<1x10x32xf32>
    %113 = vector.shape_cast %92 : vector<10x32xf32> to vector<1x10x32xf32>
    %114 = arith.mulf %112, %113 : vector<1x10x32xf32>
    %115 = vector.shape_cast %93 : vector<10x32xf32> to vector<1x10x32xf32>
    %116 = arith.addf %114, %115 : vector<1x10x32xf32>
    %cst_79 = arith.constant 0.000000e+00 : f32
    %117 = vector.broadcast %cst_79 : f32 to vector<1x10x32xf32>
    %118 = arith.maximumf %116, %117 : vector<1x10x32xf32>
    %c0_80 = arith.constant 0 : index
    %c0_81 = arith.constant 0 : index
    %c0_82 = arith.constant 0 : index
    %119 = vector.load %arg26[%c0_80, %c0_81, %c0_82] : memref<1x10x32xf32, #tpu.memory_space<vmem>>, vector<1x10x32xf32>
    tpu.vector_store %arg26[%c0_80, %c0_81, %c0_82], %118 {strides = array<i32>} : memref<1x10x32xf32, #tpu.memory_space<vmem>>, vector<1x10x32xf32>,
    %c0_83 = arith.constant 0 : index
    %c0_84 = arith.constant 0 : index
    %c0_85 = arith.constant 0 : index
    %120 = vector.load %arg19[%c0_83, %c0_84, %c0_85] : memref<2x64x32xf32, #tpu.memory_space<vmem>>, vector<1x64x32xf32>
    %121 = vector.shape_cast %120 : vector<1x64x32xf32> to vector<64x32xf32>
    %c0_86 = arith.constant 0 : index
    %c0_87 = arith.constant 0 : index
    %c0_88 = arith.constant 0 : index
    %122 = vector.load %arg20[%c0_86, %c0_87, %c0_88] : memref<2x1x32xf32, #tpu.memory_space<vmem>>, vector<1x1x32xf32>
    %123 = vector.shape_cast %122 : vector<1x1x32xf32> to vector<1x32xf32>
    %124 = tpu.concatenate %1, %9 in 1 : vector<10x32xf32>, vector<10x32xf32> -> vector<10x64xf32>
    %cst_89 = arith.constant dense<0.000000e+00> : vector<10x32xf32>
    %125 = tpu.matmul %124, %121, %cst_89 {dimension_numbers = #tpu.dot_dimension_numbers<[1], [0], [0], [1], [0, 0, 1, 1], [], []>} : vector<10x64xf32>, vector<64x32xf32>, vector<10x32xf32> -> vector<10x32xf32>
    %126 = vector.broadcast %123 : vector<1x32xf32> to vector<10x32xf32>
    %127 = arith.addf %125, %126 : vector<10x32xf32>
    %cst_90 = arith.constant 0.000000e+00 : f32
    %128 = vector.broadcast %cst_90 : f32 to vector<10x32xf32>
    %129 = arith.maximumf %127, %128 : vector<10x32xf32>
    %130 = vector.extract_strided_slice %0 {offsets = [0, 2, 0], sizes = [1, 5, 32], strides = [1, 1, 1]} : vector<1x10x32xf32> to vector<1x5x32xf32>
    %131 = vector.extract_strided_slice %8 {offsets = [0, 3, 0], sizes = [1, 5, 32], strides = [1, 1, 1]} : vector<1x10x32xf32> to vector<1x5x32xf32>
    %132 = tpu.concatenate %130, %131 in 2 : vector<1x5x32xf32>, vector<1x5x32xf32> -> vector<1x5x64xf32>
    "tpu.trace_start"() <{level = 10 : i32, message = "blk,kd->bld"}> : () -> ()
    %cst_91 = arith.constant dense<0.000000e+00> : vector<1x5x32xf32>
    %133 = tpu.matmul %132, %121, %cst_91 {dimension_numbers = #tpu.dot_dimension_numbers<[2], [0], [0, 1], [1], [0, 0, 0, 1, 1, 1], [], []>} : vector<1x5x64xf32>, vector<64x32xf32>, vector<1x5x32xf32> -> vector<1x5x32xf32>
    "tpu.trace_stop"() : () -> ()
    %134 = vector.shape_cast %123 : vector<1x32xf32> to vector<1x1x32xf32>
    %135 = vector.broadcast %134 : vector<1x1x32xf32> to vector<1x5x32xf32>
    %136 = arith.addf %133, %135 : vector<1x5x32xf32>
    %cst_92 = arith.constant 0.000000e+00 : f32
    %137 = vector.broadcast %cst_92 : f32 to vector<1x5x32xf32>
    %138 = arith.maximumf %136, %137 : vector<1x5x32xf32>
    %139 = vector.extract_strided_slice %138 {offsets = [0, 0, 0], sizes = [1, 1, 32], strides = [1, 1, 1]} : vector<1x5x32xf32> to vector<1x1x32xf32>
    %140 = vector.shape_cast %139 : vector<1x1x32xf32> to vector<1x32xf32>
    %141 = vector.extract_strided_slice %138 {offsets = [0, 0, 0], sizes = [1, 1, 32], strides = [1, 1, 1]} : vector<1x5x32xf32> to vector<1x1x32xf32>
    %142 = vector.shape_cast %141 : vector<1x1x32xf32> to vector<1x32xf32>
    %cst_93 = arith.constant 7.500000e-01 : f32
    %143 = vector.broadcast %cst_93 : f32 to vector<1x32xf32>
    %144 = arith.mulf %143, %142 : vector<1x32xf32>
    %145 = vector.extract_strided_slice %138 {offsets = [0, 1, 0], sizes = [1, 1, 32], strides = [1, 1, 1]} : vector<1x5x32xf32> to vector<1x1x32xf32>
    %146 = vector.shape_cast %145 : vector<1x1x32xf32> to vector<1x32xf32>
    %cst_94 = arith.constant 2.500000e-01 : f32
    %147 = vector.broadcast %cst_94 : f32 to vector<1x32xf32>
    %148 = arith.mulf %147, %146 : vector<1x32xf32>
    %149 = arith.addf %144, %148 : vector<1x32xf32>
    %150 = vector.extract_strided_slice %138 {offsets = [0, 0, 0], sizes = [1, 1, 32], strides = [1, 1, 1]} : vector<1x5x32xf32> to vector<1x1x32xf32>
    %151 = vector.shape_cast %150 : vector<1x1x32xf32> to vector<1x32xf32>
    %cst_95 = arith.constant 2.500000e-01 : f32
    %152 = vector.broadcast %cst_95 : f32 to vector<1x32xf32>
    %153 = arith.mulf %152, %151 : vector<1x32xf32>
    %154 = vector.extract_strided_slice %138 {offsets = [0, 1, 0], sizes = [1, 1, 32], strides = [1, 1, 1]} : vector<1x5x32xf32> to vector<1x1x32xf32>
    %155 = vector.shape_cast %154 : vector<1x1x32xf32> to vector<1x32xf32>
    %cst_96 = arith.constant 7.500000e-01 : f32
    %156 = vector.broadcast %cst_96 : f32 to vector<1x32xf32>
    %157 = arith.mulf %156, %155 : vector<1x32xf32>
    %158 = arith.addf %153, %157 : vector<1x32xf32>
    %159 = vector.extract_strided_slice %138 {offsets = [0, 1, 0], sizes = [1, 1, 32], strides = [1, 1, 1]} : vector<1x5x32xf32> to vector<1x1x32xf32>
    %160 = vector.shape_cast %159 : vector<1x1x32xf32> to vector<1x32xf32>
    %cst_97 = arith.constant 7.500000e-01 : f32
    %161 = vector.broadcast %cst_97 : f32 to vector<1x32xf32>
    %162 = arith.mulf %161, %160 : vector<1x32xf32>
    %163 = vector.extract_strided_slice %138 {offsets = [0, 2, 0], sizes = [1, 1, 32], strides = [1, 1, 1]} : vector<1x5x32xf32> to vector<1x1x32xf32>
    %164 = vector.shape_cast %163 : vector<1x1x32xf32> to vector<1x32xf32>
    %cst_98 = arith.constant 2.500000e-01 : f32
    %165 = vector.broadcast %cst_98 : f32 to vector<1x32xf32>
    %166 = arith.mulf %165, %164 : vector<1x32xf32>
    %167 = arith.addf %162, %166 : vector<1x32xf32>
    %168 = vector.extract_strided_slice %138 {offsets = [0, 1, 0], sizes = [1, 1, 32], strides = [1, 1, 1]} : vector<1x5x32xf32> to vector<1x1x32xf32>
    %169 = vector.shape_cast %168 : vector<1x1x32xf32> to vector<1x32xf32>
    %cst_99 = arith.constant 2.500000e-01 : f32
    %170 = vector.broadcast %cst_99 : f32 to vector<1x32xf32>
    %171 = arith.mulf %170, %169 : vector<1x32xf32>
    %172 = vector.extract_strided_slice %138 {offsets = [0, 2, 0], sizes = [1, 1, 32], strides = [1, 1, 1]} : vector<1x5x32xf32> to vector<1x1x32xf32>
    %173 = vector.shape_cast %172 : vector<1x1x32xf32> to vector<1x32xf32>
    %cst_100 = arith.constant 7.500000e-01 : f32
    %174 = vector.broadcast %cst_100 : f32 to vector<1x32xf32>
    %175 = arith.mulf %174, %173 : vector<1x32xf32>
    %176 = arith.addf %171, %175 : vector<1x32xf32>
    %177 = vector.extract_strided_slice %138 {offsets = [0, 2, 0], sizes = [1, 1, 32], strides = [1, 1, 1]} : vector<1x5x32xf32> to vector<1x1x32xf32>
    %178 = vector.shape_cast %177 : vector<1x1x32xf32> to vector<1x32xf32>
    %cst_101 = arith.constant 7.500000e-01 : f32
    %179 = vector.broadcast %cst_101 : f32 to vector<1x32xf32>
    %180 = arith.mulf %179, %178 : vector<1x32xf32>
    %181 = vector.extract_strided_slice %138 {offsets = [0, 3, 0], sizes = [1, 1, 32], strides = [1, 1, 1]} : vector<1x5x32xf32> to vector<1x1x32xf32>
    %182 = vector.shape_cast %181 : vector<1x1x32xf32> to vector<1x32xf32>
    %cst_102 = arith.constant 2.500000e-01 : f32
    %183 = vector.broadcast %cst_102 : f32 to vector<1x32xf32>
    %184 = arith.mulf %183, %182 : vector<1x32xf32>
    %185 = arith.addf %180, %184 : vector<1x32xf32>
    %186 = vector.extract_strided_slice %138 {offsets = [0, 2, 0], sizes = [1, 1, 32], strides = [1, 1, 1]} : vector<1x5x32xf32> to vector<1x1x32xf32>
    %187 = vector.shape_cast %186 : vector<1x1x32xf32> to vector<1x32xf32>
    %cst_103 = arith.constant 2.500000e-01 : f32
    %188 = vector.broadcast %cst_103 : f32 to vector<1x32xf32>
    %189 = arith.mulf %188, %187 : vector<1x32xf32>
    %190 = vector.extract_strided_slice %138 {offsets = [0, 3, 0], sizes = [1, 1, 32], strides = [1, 1, 1]} : vector<1x5x32xf32> to vector<1x1x32xf32>
    %191 = vector.shape_cast %190 : vector<1x1x32xf32> to vector<1x32xf32>
    %cst_104 = arith.constant 7.500000e-01 : f32
    %192 = vector.broadcast %cst_104 : f32 to vector<1x32xf32>
    %193 = arith.mulf %192, %191 : vector<1x32xf32>
    %194 = arith.addf %189, %193 : vector<1x32xf32>
    %195 = vector.extract_strided_slice %138 {offsets = [0, 3, 0], sizes = [1, 1, 32], strides = [1, 1, 1]} : vector<1x5x32xf32> to vector<1x1x32xf32>
    %196 = vector.shape_cast %195 : vector<1x1x32xf32> to vector<1x32xf32>
    %cst_105 = arith.constant 7.500000e-01 : f32
    %197 = vector.broadcast %cst_105 : f32 to vector<1x32xf32>
    %198 = arith.mulf %197, %196 : vector<1x32xf32>
    %199 = vector.extract_strided_slice %138 {offsets = [0, 4, 0], sizes = [1, 1, 32], strides = [1, 1, 1]} : vector<1x5x32xf32> to vector<1x1x32xf32>
    %200 = vector.shape_cast %199 : vector<1x1x32xf32> to vector<1x32xf32>
    %cst_106 = arith.constant 2.500000e-01 : f32
    %201 = vector.broadcast %cst_106 : f32 to vector<1x32xf32>
    %202 = arith.mulf %201, %200 : vector<1x32xf32>
    %203 = arith.addf %198, %202 : vector<1x32xf32>
    %204 = vector.extract_strided_slice %138 {offsets = [0, 3, 0], sizes = [1, 1, 32], strides = [1, 1, 1]} : vector<1x5x32xf32> to vector<1x1x32xf32>
    %205 = vector.shape_cast %204 : vector<1x1x32xf32> to vector<1x32xf32>
    %cst_107 = arith.constant 2.500000e-01 : f32
    %206 = vector.broadcast %cst_107 : f32 to vector<1x32xf32>
    %207 = arith.mulf %206, %205 : vector<1x32xf32>
    %208 = vector.extract_strided_slice %138 {offsets = [0, 4, 0], sizes = [1, 1, 32], strides = [1, 1, 1]} : vector<1x5x32xf32> to vector<1x1x32xf32>
    %209 = vector.shape_cast %208 : vector<1x1x32xf32> to vector<1x32xf32>
    %cst_108 = arith.constant 7.500000e-01 : f32
    %210 = vector.broadcast %cst_108 : f32 to vector<1x32xf32>
    %211 = arith.mulf %210, %209 : vector<1x32xf32>
    %212 = arith.addf %207, %211 : vector<1x32xf32>
    %213 = vector.extract_strided_slice %138 {offsets = [0, 4, 0], sizes = [1, 1, 32], strides = [1, 1, 1]} : vector<1x5x32xf32> to vector<1x1x32xf32>
    %214 = vector.shape_cast %213 : vector<1x1x32xf32> to vector<1x32xf32>
    %215 = vector.shape_cast %140 : vector<1x32xf32> to vector<1x1x32xf32>
    %216 = vector.shape_cast %149 : vector<1x32xf32> to vector<1x1x32xf32>
    %217 = vector.shape_cast %158 : vector<1x32xf32> to vector<1x1x32xf32>
    %218 = vector.shape_cast %167 : vector<1x32xf32> to vector<1x1x32xf32>
    %219 = vector.shape_cast %176 : vector<1x32xf32> to vector<1x1x32xf32>
    %220 = vector.shape_cast %185 : vector<1x32xf32> to vector<1x1x32xf32>
    %221 = vector.shape_cast %194 : vector<1x32xf32> to vector<1x1x32xf32>
    %222 = vector.shape_cast %203 : vector<1x32xf32> to vector<1x1x32xf32>
    %223 = vector.shape_cast %212 : vector<1x32xf32> to vector<1x1x32xf32>
    %224 = vector.shape_cast %214 : vector<1x32xf32> to vector<1x1x32xf32>
    %225 = tpu.concatenate %215, %216, %217, %218, %219, %220, %221, %222, %223, %224 in 1 : vector<1x1x32xf32>, vector<1x1x32xf32>, vector<1x1x32xf32>, vector<1x1x32xf32>, vector<1x1x32xf32>, vector<1x1x32xf32>, vector<1x1x32xf32>, vector<1x1x32xf32>, vector<1x1x32xf32>, vector<1x1x32xf32> -> vector<1x10x32xf32>
    %226 = vector.shape_cast %225 : vector<1x10x32xf32> to vector<10x32xf32>
    %227 = arith.addf %129, %226 : vector<10x32xf32>
    %228 = vector.shape_cast %227 : vector<10x32xf32> to vector<1x10x32xf32>
    %c1_109 = arith.constant 1 : index
    %c0_110 = arith.constant 0 : index
    %c0_111 = arith.constant 0 : index
    %229 = vector.load %arg19[%c1_109, %c0_110, %c0_111] : memref<2x64x32xf32, #tpu.memory_space<vmem>>, vector<1x64x32xf32>
    %230 = vector.shape_cast %229 : vector<1x64x32xf32> to vector<64x32xf32>
    %c1_112 = arith.constant 1 : index
    %c0_113 = arith.constant 0 : index
    %c0_114 = arith.constant 0 : index
    %231 = vector.load %arg20[%c1_112, %c0_113, %c0_114] : memref<2x1x32xf32, #tpu.memory_space<vmem>>, vector<1x1x32xf32>
    %232 = vector.shape_cast %231 : vector<1x1x32xf32> to vector<1x32xf32>
    %233 = tpu.concatenate %5, %227 in 1 : vector<10x32xf32>, vector<10x32xf32> -> vector<10x64xf32>
    %cst_115 = arith.constant dense<0.000000e+00> : vector<10x32xf32>
    %234 = tpu.matmul %233, %230, %cst_115 {dimension_numbers = #tpu.dot_dimension_numbers<[1], [0], [0], [1], [0, 0, 1, 1], [], []>} : vector<10x64xf32>, vector<64x32xf32>, vector<10x32xf32> -> vector<10x32xf32>
    %235 = vector.broadcast %232 : vector<1x32xf32> to vector<10x32xf32>
    %236 = arith.addf %234, %235 : vector<10x32xf32>
    %cst_116 = arith.constant 0.000000e+00 : f32
    %237 = vector.broadcast %cst_116 : f32 to vector<10x32xf32>
    %238 = arith.maximumf %236, %237 : vector<10x32xf32>
    %239 = vector.extract_strided_slice %4 {offsets = [0, 0, 0], sizes = [1, 7, 32], strides = [1, 1, 1]} : vector<1x10x32xf32> to vector<1x7x32xf32>
    %240 = vector.extract_strided_slice %228 {offsets = [0, 3, 0], sizes = [1, 7, 32], strides = [1, 1, 1]} : vector<1x10x32xf32> to vector<1x7x32xf32>
    %241 = tpu.concatenate %239, %240 in 2 : vector<1x7x32xf32>, vector<1x7x32xf32> -> vector<1x7x64xf32>
    "tpu.trace_start"() <{level = 10 : i32, message = "blk,kd->bld"}> : () -> ()
    %cst_117 = arith.constant dense<0.000000e+00> : vector<1x7x32xf32>
    %242 = tpu.matmul %241, %230, %cst_117 {dimension_numbers = #tpu.dot_dimension_numbers<[2], [0], [0, 1], [1], [0, 0, 0, 1, 1, 1], [], []>} : vector<1x7x64xf32>, vector<64x32xf32>, vector<1x7x32xf32> -> vector<1x7x32xf32>
    "tpu.trace_stop"() : () -> ()
    %243 = vector.shape_cast %232 : vector<1x32xf32> to vector<1x1x32xf32>
    %244 = vector.broadcast %243 : vector<1x1x32xf32> to vector<1x7x32xf32>
    %245 = arith.addf %242, %244 : vector<1x7x32xf32>
    %cst_118 = arith.constant 0.000000e+00 : f32
    %246 = vector.broadcast %cst_118 : f32 to vector<1x7x32xf32>
    %247 = arith.maximumf %245, %246 : vector<1x7x32xf32>
    %248 = vector.extract_strided_slice %247 {offsets = [0, 0, 0], sizes = [1, 1, 32], strides = [1, 1, 1]} : vector<1x7x32xf32> to vector<1x1x32xf32>
    %249 = vector.shape_cast %248 : vector<1x1x32xf32> to vector<1x32xf32>
    %250 = vector.extract_strided_slice %247 {offsets = [0, 0, 0], sizes = [1, 1, 32], strides = [1, 1, 1]} : vector<1x7x32xf32> to vector<1x1x32xf32>
    %251 = vector.shape_cast %250 : vector<1x1x32xf32> to vector<1x32xf32>
    %cst_119 = arith.constant 4.500000e-01 : f32
    %252 = vector.broadcast %cst_119 : f32 to vector<1x32xf32>
    %253 = arith.mulf %252, %251 : vector<1x32xf32>
    %254 = vector.extract_strided_slice %247 {offsets = [0, 1, 0], sizes = [1, 1, 32], strides = [1, 1, 1]} : vector<1x7x32xf32> to vector<1x1x32xf32>
    %255 = vector.shape_cast %254 : vector<1x1x32xf32> to vector<1x32xf32>
    %cst_120 = arith.constant 5.500000e-01 : f32
    %256 = vector.broadcast %cst_120 : f32 to vector<1x32xf32>
    %257 = arith.mulf %256, %255 : vector<1x32xf32>
    %258 = arith.addf %253, %257 : vector<1x32xf32>
    %259 = vector.extract_strided_slice %247 {offsets = [0, 1, 0], sizes = [1, 1, 32], strides = [1, 1, 1]} : vector<1x7x32xf32> to vector<1x1x32xf32>
    %260 = vector.shape_cast %259 : vector<1x1x32xf32> to vector<1x32xf32>
    %cst_121 = arith.constant 7.500000e-01 : f32
    %261 = vector.broadcast %cst_121 : f32 to vector<1x32xf32>
    %262 = arith.mulf %261, %260 : vector<1x32xf32>
    %263 = vector.extract_strided_slice %247 {offsets = [0, 2, 0], sizes = [1, 1, 32], strides = [1, 1, 1]} : vector<1x7x32xf32> to vector<1x1x32xf32>
    %264 = vector.shape_cast %263 : vector<1x1x32xf32> to vector<1x32xf32>
    %cst_122 = arith.constant 2.500000e-01 : f32
    %265 = vector.broadcast %cst_122 : f32 to vector<1x32xf32>
    %266 = arith.mulf %265, %264 : vector<1x32xf32>
    %267 = arith.addf %262, %266 : vector<1x32xf32>
    %268 = vector.extract_strided_slice %247 {offsets = [0, 1, 0], sizes = [1, 1, 32], strides = [1, 1, 1]} : vector<1x7x32xf32> to vector<1x1x32xf32>
    %269 = vector.shape_cast %268 : vector<1x1x32xf32> to vector<1x32xf32>
    %cst_123 = arith.constant 5.000000e-02 : f32
    %270 = vector.broadcast %cst_123 : f32 to vector<1x32xf32>
    %271 = arith.mulf %270, %269 : vector<1x32xf32>
    %272 = vector.extract_strided_slice %247 {offsets = [0, 2, 0], sizes = [1, 1, 32], strides = [1, 1, 1]} : vector<1x7x32xf32> to vector<1x1x32xf32>
    %273 = vector.shape_cast %272 : vector<1x1x32xf32> to vector<1x32xf32>
    %cst_124 = arith.constant 0.949999988 : f32
    %274 = vector.broadcast %cst_124 : f32 to vector<1x32xf32>
    %275 = arith.mulf %274, %273 : vector<1x32xf32>
    %276 = arith.addf %271, %275 : vector<1x32xf32>
    %277 = vector.extract_strided_slice %247 {offsets = [0, 2, 0], sizes = [1, 1, 32], strides = [1, 1, 1]} : vector<1x7x32xf32> to vector<1x1x32xf32>
    %278 = vector.shape_cast %277 : vector<1x1x32xf32> to vector<1x32xf32>
    %cst_125 = arith.constant 3.500000e-01 : f32
    %279 = vector.broadcast %cst_125 : f32 to vector<1x32xf32>
    %280 = arith.mulf %279, %278 : vector<1x32xf32>
    %281 = vector.extract_strided_slice %247 {offsets = [0, 3, 0], sizes = [1, 1, 32], strides = [1, 1, 1]} : vector<1x7x32xf32> to vector<1x1x32xf32>
    %282 = vector.shape_cast %281 : vector<1x1x32xf32> to vector<1x32xf32>
    %cst_126 = arith.constant 6.500000e-01 : f32
    %283 = vector.broadcast %cst_126 : f32 to vector<1x32xf32>
    %284 = arith.mulf %283, %282 : vector<1x32xf32>
    %285 = arith.addf %280, %284 : vector<1x32xf32>
    %286 = vector.extract_strided_slice %247 {offsets = [0, 3, 0], sizes = [1, 1, 32], strides = [1, 1, 1]} : vector<1x7x32xf32> to vector<1x1x32xf32>
    %287 = vector.shape_cast %286 : vector<1x1x32xf32> to vector<1x32xf32>
    %cst_127 = arith.constant 6.500000e-01 : f32
    %288 = vector.broadcast %cst_127 : f32 to vector<1x32xf32>
    %289 = arith.mulf %288, %287 : vector<1x32xf32>
    %290 = vector.extract_strided_slice %247 {offsets = [0, 4, 0], sizes = [1, 1, 32], strides = [1, 1, 1]} : vector<1x7x32xf32> to vector<1x1x32xf32>
    %291 = vector.shape_cast %290 : vector<1x1x32xf32> to vector<1x32xf32>
    %cst_128 = arith.constant 3.500000e-01 : f32
    %292 = vector.broadcast %cst_128 : f32 to vector<1x32xf32>
    %293 = arith.mulf %292, %291 : vector<1x32xf32>
    %294 = arith.addf %289, %293 : vector<1x32xf32>
    %295 = vector.extract_strided_slice %247 {offsets = [0, 4, 0], sizes = [1, 1, 32], strides = [1, 1, 1]} : vector<1x7x32xf32> to vector<1x1x32xf32>
    %296 = vector.shape_cast %295 : vector<1x1x32xf32> to vector<1x32xf32>
    %cst_129 = arith.constant 0.949999988 : f32
    %297 = vector.broadcast %cst_129 : f32 to vector<1x32xf32>
    %298 = arith.mulf %297, %296 : vector<1x32xf32>
    %299 = vector.extract_strided_slice %247 {offsets = [0, 5, 0], sizes = [1, 1, 32], strides = [1, 1, 1]} : vector<1x7x32xf32> to vector<1x1x32xf32>
    %300 = vector.shape_cast %299 : vector<1x1x32xf32> to vector<1x32xf32>
    %cst_130 = arith.constant 5.000000e-02 : f32
    %301 = vector.broadcast %cst_130 : f32 to vector<1x32xf32>
    %302 = arith.mulf %301, %300 : vector<1x32xf32>
    %303 = arith.addf %298, %302 : vector<1x32xf32>
    %304 = vector.extract_strided_slice %247 {offsets = [0, 4, 0], sizes = [1, 1, 32], strides = [1, 1, 1]} : vector<1x7x32xf32> to vector<1x1x32xf32>
    %305 = vector.shape_cast %304 : vector<1x1x32xf32> to vector<1x32xf32>
    %cst_131 = arith.constant 2.500000e-01 : f32
    %306 = vector.broadcast %cst_131 : f32 to vector<1x32xf32>
    %307 = arith.mulf %306, %305 : vector<1x32xf32>
    %308 = vector.extract_strided_slice %247 {offsets = [0, 5, 0], sizes = [1, 1, 32], strides = [1, 1, 1]} : vector<1x7x32xf32> to vector<1x1x32xf32>
    %309 = vector.shape_cast %308 : vector<1x1x32xf32> to vector<1x32xf32>
    %cst_132 = arith.constant 7.500000e-01 : f32
    %310 = vector.broadcast %cst_132 : f32 to vector<1x32xf32>
    %311 = arith.mulf %310, %309 : vector<1x32xf32>
    %312 = arith.addf %307, %311 : vector<1x32xf32>
    %313 = vector.extract_strided_slice %247 {offsets = [0, 5, 0], sizes = [1, 1, 32], strides = [1, 1, 1]} : vector<1x7x32xf32> to vector<1x1x32xf32>
    %314 = vector.shape_cast %313 : vector<1x1x32xf32> to vector<1x32xf32>
    %cst_133 = arith.constant 5.500000e-01 : f32
    %315 = vector.broadcast %cst_133 : f32 to vector<1x32xf32>
    %316 = arith.mulf %315, %314 : vector<1x32xf32>
    %317 = vector.extract_strided_slice %247 {offsets = [0, 6, 0], sizes = [1, 1, 32], strides = [1, 1, 1]} : vector<1x7x32xf32> to vector<1x1x32xf32>
    %318 = vector.shape_cast %317 : vector<1x1x32xf32> to vector<1x32xf32>
    %cst_134 = arith.constant 4.500000e-01 : f32
    %319 = vector.broadcast %cst_134 : f32 to vector<1x32xf32>
    %320 = arith.mulf %319, %318 : vector<1x32xf32>
    %321 = arith.addf %316, %320 : vector<1x32xf32>
    %322 = vector.extract_strided_slice %247 {offsets = [0, 6, 0], sizes = [1, 1, 32], strides = [1, 1, 1]} : vector<1x7x32xf32> to vector<1x1x32xf32>
    %323 = vector.shape_cast %322 : vector<1x1x32xf32> to vector<1x32xf32>
    %324 = vector.shape_cast %249 : vector<1x32xf32> to vector<1x1x32xf32>
    %325 = vector.shape_cast %258 : vector<1x32xf32> to vector<1x1x32xf32>
    %326 = vector.shape_cast %267 : vector<1x32xf32> to vector<1x1x32xf32>
    %327 = vector.shape_cast %276 : vector<1x32xf32> to vector<1x1x32xf32>
    %328 = vector.shape_cast %285 : vector<1x32xf32> to vector<1x1x32xf32>
    %329 = vector.shape_cast %294 : vector<1x32xf32> to vector<1x1x32xf32>
    %330 = vector.shape_cast %303 : vector<1x32xf32> to vector<1x1x32xf32>
    %331 = vector.shape_cast %312 : vector<1x32xf32> to vector<1x1x32xf32>
    %332 = vector.shape_cast %321 : vector<1x32xf32> to vector<1x1x32xf32>
    %333 = vector.shape_cast %323 : vector<1x32xf32> to vector<1x1x32xf32>
    %334 = tpu.concatenate %324, %325, %326, %327, %328, %329, %330, %331, %332, %333 in 1 : vector<1x1x32xf32>, vector<1x1x32xf32>, vector<1x1x32xf32>, vector<1x1x32xf32>, vector<1x1x32xf32>, vector<1x1x32xf32>, vector<1x1x32xf32>, vector<1x1x32xf32>, vector<1x1x32xf32>, vector<1x1x32xf32> -> vector<1x10x32xf32>
    %335 = vector.shape_cast %334 : vector<1x10x32xf32> to vector<10x32xf32>
    %336 = arith.addf %238, %335 : vector<10x32xf32>
    %337 = tpu.concatenate %227, %336 in 1 : vector<10x32xf32>, vector<10x32xf32> -> vector<10x64xf32>
    %c0_135 = arith.constant 0 : index
    %c0_136 = arith.constant 0 : index
    %338 = vector.load %arg21[%c0_135, %c0_136] : memref<64x32xf32, #tpu.memory_space<vmem>>, vector<64x32xf32>
    %cst_137 = arith.constant dense<0.000000e+00> : vector<10x32xf32>
    %339 = tpu.matmul %337, %338, %cst_137 {dimension_numbers = #tpu.dot_dimension_numbers<[1], [0], [0], [1], [0, 0, 1, 1], [], []>} : vector<10x64xf32>, vector<64x32xf32>, vector<10x32xf32> -> vector<10x32xf32>
    %c0_138 = arith.constant 0 : index
    %c0_139 = arith.constant 0 : index
    %340 = vector.load %arg22[%c0_138, %c0_139] : memref<1x32xf32, #tpu.memory_space<vmem>>, vector<1x32xf32>
    %341 = vector.broadcast %340 : vector<1x32xf32> to vector<10x32xf32>
    %342 = arith.addf %339, %341 : vector<10x32xf32>
    %c0_140 = arith.constant 0 : index
    %c0_141 = arith.constant 0 : index
    %343 = vector.load %arg23[%c0_140, %c0_141] : memref<10x32xf32, #tpu.memory_space<vmem>>, vector<10x32xf32>
    %c0_142 = arith.constant 0 : index
    %c0_143 = arith.constant 0 : index
    %344 = vector.load %arg24[%c0_142, %c0_143] : memref<10x32xf32, #tpu.memory_space<vmem>>, vector<10x32xf32>
    %345 = vector.shape_cast %342 : vector<10x32xf32> to vector<1x10x32xf32>
    %cst_144 = arith.constant dense<0.000000e+00> : vector<1xf32>
    %346 = vector.multi_reduction <add>, %345, %cst_144 [1, 2] : vector<1x10x32xf32> to vector<1xf32>
    %347 = vector.shape_cast %346 : vector<1xf32> to vector<1x1x1xf32>
    %cst_145 = arith.constant 3.200000e+02 : f32
    %348 = vector.broadcast %cst_145 : f32 to vector<1x1x1xf32>
    %349 = arith.divf %347, %348 : vector<1x1x1xf32>
    %350 = vector.broadcast %349 : vector<1x1x1xf32> to vector<1x10x32xf32>
    %351 = arith.subf %345, %350 : vector<1x10x32xf32>
    %352 = arith.mulf %351, %351 : vector<1x10x32xf32>
    %cst_146 = arith.constant dense<0.000000e+00> : vector<1xf32>
    %353 = vector.multi_reduction <add>, %352, %cst_146 [1, 2] : vector<1x10x32xf32> to vector<1xf32>
    %354 = vector.shape_cast %353 : vector<1xf32> to vector<1x1x1xf32>
    %cst_147 = arith.constant 3.200000e+02 : f32
    %355 = vector.broadcast %cst_147 : f32 to vector<1x1x1xf32>
    %356 = arith.divf %354, %355 : vector<1x1x1xf32>
    %357 = vector.broadcast %349 : vector<1x1x1xf32> to vector<1x10x32xf32>
    %358 = arith.subf %345, %357 : vector<1x10x32xf32>
    %cst_148 = arith.constant 9.99999974E-6 : f32
    %359 = vector.broadcast %cst_148 : f32 to vector<1x1x1xf32>
    %360 = arith.addf %356, %359 : vector<1x1x1xf32>
    %361 = math.rsqrt %360 : vector<1x1x1xf32>
    %362 = vector.broadcast %361 : vector<1x1x1xf32> to vector<1x10x32xf32>
    %363 = arith.mulf %358, %362 : vector<1x10x32xf32>
    %364 = vector.shape_cast %343 : vector<10x32xf32> to vector<1x10x32xf32>
    %365 = arith.mulf %363, %364 : vector<1x10x32xf32>
    %366 = vector.shape_cast %344 : vector<10x32xf32> to vector<1x10x32xf32>
    %367 = arith.addf %365, %366 : vector<1x10x32xf32>
    %cst_149 = arith.constant 0.000000e+00 : f32
    %368 = vector.broadcast %cst_149 : f32 to vector<1x10x32xf32>
    %369 = arith.maximumf %367, %368 : vector<1x10x32xf32>
    %c0_150 = arith.constant 0 : index
    %c0_151 = arith.constant 0 : index
    %c0_152 = arith.constant 0 : index
    %370 = vector.load %arg27[%c0_150, %c0_151, %c0_152] : memref<1x10x32xf32, #tpu.memory_space<vmem>>, vector<1x10x32xf32>
    tpu.vector_store %arg27[%c0_150, %c0_151, %c0_152], %369 {strides = array<i32>} : memref<1x10x32xf32, #tpu.memory_space<vmem>>, vector<1x10x32xf32>,
    return
  }
  func.func @transform_0(%arg0: i32) -> (i32, i32, i32) {
    %c0_i32 = arith.constant 0 : i32
    %c0_i32_0 = arith.constant 0 : i32
    %c0_i32_1 = arith.constant 0 : i32
    return %arg0, %c0_i32, %c0_i32_0 : i32, i32, i32
  }
  func.func @transform_1(%arg0: i32) -> (i32, i32, i32) {
    %c0_i32 = arith.constant 0 : i32
    %c0_i32_0 = arith.constant 0 : i32
    %c0_i32_1 = arith.constant 0 : i32
    return %arg0, %c0_i32, %c0_i32_0 : i32, i32, i32
  }
  func.func @transform_2(%arg0: i32) -> (i32, i32, i32) {
    %c0_i32 = arith.constant 0 : i32
    %c0_i32_0 = arith.constant 0 : i32
    %c0_i32_1 = arith.constant 0 : i32
    return %arg0, %c0_i32, %c0_i32_0 : i32, i32, i32
  }
  func.func @transform_3(%arg0: i32) -> (i32, i32, i32) {
    %c0_i32 = arith.constant 0 : i32
    %c0_i32_0 = arith.constant 0 : i32
    %c0_i32_1 = arith.constant 0 : i32
    return %arg0, %c0_i32, %c0_i32_0 : i32, i32, i32
  }
  func.func @transform_4(%arg0: i32) -> (i32, i32, i32) {
    %c0_i32 = arith.constant 0 : i32
    %c0_i32_0 = arith.constant 0 : i32
    %c0_i32_1 = arith.constant 0 : i32
    return %arg0, %c0_i32, %c0_i32_0 : i32, i32, i32
  }
  func.func @transform_5(%arg0: i32) -> (i32, i32, i32) {
    %c0_i32 = arith.constant 0 : i32
    %c0_i32_0 = arith.constant 0 : i32
    %c0_i32_1 = arith.constant 0 : i32
    return %arg0, %c0_i32, %c0_i32_0 : i32, i32, i32
  }
  func.func @transform_6(%arg0: i32) -> (i32, i32, i32) {
    %c0_i32 = arith.constant 0 : i32
    %c0_i32_0 = arith.constant 0 : i32
    %c0_i32_1 = arith.constant 0 : i32
    %c0_i32_2 = arith.constant 0 : i32
    return %c0_i32, %c0_i32_0, %c0_i32_1 : i32, i32, i32
  }
  func.func @transform_7(%arg0: i32) -> (i32, i32, i32) {
    %c0_i32 = arith.constant 0 : i32
    %c0_i32_0 = arith.constant 0 : i32
    %c0_i32_1 = arith.constant 0 : i32
    %c0_i32_2 = arith.constant 0 : i32
    return %c0_i32, %c0_i32_0, %c0_i32_1 : i32, i32, i32
  }
  func.func @transform_8(%arg0: i32) -> (i32, i32) {
    %c0_i32 = arith.constant 0 : i32
    %c0_i32_0 = arith.constant 0 : i32
    %c0_i32_1 = arith.constant 0 : i32
    return %c0_i32, %c0_i32_0 : i32, i32
  }
  func.func @transform_9(%arg0: i32) -> (i32, i32) {
    %c0_i32 = arith.constant 0 : i32
    %c0_i32_0 = arith.constant 0 : i32
    %c0_i32_1 = arith.constant 0 : i32
    return %c0_i32, %c0_i32_0 : i32, i32
  }
  func.func @transform_10(%arg0: i32) -> (i32, i32) {
    %c0_i32 = arith.constant 0 : i32
    %c0_i32_0 = arith.constant 0 : i32
    %c0_i32_1 = arith.constant 0 : i32
    return %c0_i32, %c0_i32_0 : i32, i32
  }
  func.func @transform_11(%arg0: i32) -> (i32, i32) {
    %c0_i32 = arith.constant 0 : i32
    %c0_i32_0 = arith.constant 0 : i32
    %c0_i32_1 = arith.constant 0 : i32
    return %c0_i32, %c0_i32_0 : i32, i32
  }
  func.func @transform_12(%arg0: i32) -> (i32, i32, i32) {
    %c0_i32 = arith.constant 0 : i32
    %c0_i32_0 = arith.constant 0 : i32
    %c0_i32_1 = arith.constant 0 : i32
    %c0_i32_2 = arith.constant 0 : i32
    return %c0_i32, %c0_i32_0, %c0_i32_1 : i32, i32, i32
  }
  func.func @transform_13(%arg0: i32) -> (i32, i32, i32) {
    %c0_i32 = arith.constant 0 : i32
    %c0_i32_0 = arith.constant 0 : i32
    %c0_i32_1 = arith.constant 0 : i32
    %c0_i32_2 = arith.constant 0 : i32
    return %c0_i32, %c0_i32_0, %c0_i32_1 : i32, i32, i32
  }
  func.func @transform_14(%arg0: i32) -> (i32, i32) {
    %c0_i32 = arith.constant 0 : i32
    %c0_i32_0 = arith.constant 0 : i32
    %c0_i32_1 = arith.constant 0 : i32
    return %c0_i32, %c0_i32_0 : i32, i32
  }
  func.func @transform_15(%arg0: i32) -> (i32, i32) {
    %c0_i32 = arith.constant 0 : i32
    %c0_i32_0 = arith.constant 0 : i32
    %c0_i32_1 = arith.constant 0 : i32
    return %c0_i32, %c0_i32_0 : i32, i32
  }
  func.func @transform_16(%arg0: i32) -> (i32, i32) {
    %c0_i32 = arith.constant 0 : i32
    %c0_i32_0 = arith.constant 0 : i32
    %c0_i32_1 = arith.constant 0 : i32
    return %c0_i32, %c0_i32_0 : i32, i32
  }
  func.func @transform_17(%arg0: i32) -> (i32, i32) {
    %c0_i32 = arith.constant 0 : i32
    %c0_i32_0 = arith.constant 0 : i32
    %c0_i32_1 = arith.constant 0 : i32
    return %c0_i32, %c0_i32_0 : i32, i32
  }
  func.func @transform_18(%arg0: i32) -> (i32, i32, i32) {
    %c0_i32 = arith.constant 0 : i32
    %c0_i32_0 = arith.constant 0 : i32
    %c0_i32_1 = arith.constant 0 : i32
    %c0_i32_2 = arith.constant 0 : i32
    return %c0_i32, %c0_i32_0, %c0_i32_1 : i32, i32, i32
  }
  func.func @transform_19(%arg0: i32) -> (i32, i32, i32) {
    %c0_i32 = arith.constant 0 : i32
    %c0_i32_0 = arith.constant 0 : i32
    %c0_i32_1 = arith.constant 0 : i32
    %c0_i32_2 = arith.constant 0 : i32
    return %c0_i32, %c0_i32_0, %c0_i32_1 : i32, i32, i32
  }
  func.func @transform_20(%arg0: i32) -> (i32, i32) {
    %c0_i32 = arith.constant 0 : i32
    %c0_i32_0 = arith.constant 0 : i32
    %c0_i32_1 = arith.constant 0 : i32
    return %c0_i32, %c0_i32_0 : i32, i32
  }
  func.func @transform_21(%arg0: i32) -> (i32, i32) {
    %c0_i32 = arith.constant 0 : i32
    %c0_i32_0 = arith.constant 0 : i32
    %c0_i32_1 = arith.constant 0 : i32
    return %c0_i32, %c0_i32_0 : i32, i32
  }
  func.func @transform_22(%arg0: i32) -> (i32, i32) {
    %c0_i32 = arith.constant 0 : i32
    %c0_i32_0 = arith.constant 0 : i32
    %c0_i32_1 = arith.constant 0 : i32
    return %c0_i32, %c0_i32_0 : i32, i32
  }
  func.func @transform_23(%arg0: i32) -> (i32, i32) {
    %c0_i32 = arith.constant 0 : i32
    %c0_i32_0 = arith.constant 0 : i32
    %c0_i32_1 = arith.constant 0 : i32
    return %c0_i32, %c0_i32_0 : i32, i32
  }
  func.func @transform_24(%arg0: i32) -> (i32, i32, i32) {
    %c0_i32 = arith.constant 0 : i32
    %c0_i32_0 = arith.constant 0 : i32
    %c0_i32_1 = arith.constant 0 : i32
    return %arg0, %c0_i32, %c0_i32_0 : i32, i32, i32
  }
  func.func @transform_25(%arg0: i32) -> (i32, i32, i32) {
    %c0_i32 = arith.constant 0 : i32
    %c0_i32_0 = arith.constant 0 : i32
    %c0_i32_1 = arith.constant 0 : i32
    return %arg0, %c0_i32, %c0_i32_0 : i32, i32, i32
  }
  func.func @transform_26(%arg0: i32) -> (i32, i32, i32) {
    %c0_i32 = arith.constant 0 : i32
    %c0_i32_0 = arith.constant 0 : i32
    %c0_i32_1 = arith.constant 0 : i32
    return %arg0, %c0_i32, %c0_i32_0 : i32, i32, i32
  }
}

</mosaic_0001>

<llo_original>
// kernel: tpu_custom_call.1
$region0: #{tpu_custom_call.1}
  #allocation0 [shape = 'u32[]', space=smem, size = 0x4, offset = 0x4, fixed_abs, tag = 'smem constant byte address 0x4 - core index']
  #allocation1 [shape = 'u32[72,128]{1,0:T(1,128)}', space=vmem, size = 0x9000, scoped, tag = 'internal scratch']
  %s0 = inlined_call_operand.vmem [shape: f32[2,10,32], index: 0, kind: input, shape index: {}]
  %s1 = inlined_call_operand.vmem [shape: f32[2,10,32], index: 1, kind: input, shape index: {}]
  %s2 = inlined_call_operand.vmem [shape: f32[2,10,32], index: 2, kind: input, shape index: {}]
  %s3 = inlined_call_operand.vmem [shape: f32[2,10,32], index: 3, kind: input, shape index: {}]
  %s4 = inlined_call_operand.vmem [shape: f32[2,10,32], index: 4, kind: input, shape index: {}]
  %s5 = inlined_call_operand.vmem [shape: f32[2,10,32], index: 5, kind: input, shape index: {}]
  %s6 = inlined_call_operand.vmem [shape: f32[2,64,32], index: 6, kind: input, shape index: {}]
  %s7 = inlined_call_operand.vmem [shape: f32[2,1,32], index: 7, kind: input, shape index: {}]
  %s8 = inlined_call_operand.vmem [shape: f32[64,32], index: 8, kind: input, shape index: {}]
  %s9 = inlined_call_operand.vmem [shape: f32[1,32], index: 9, kind: input, shape index: {}]
  %s10 = inlined_call_operand.vmem [shape: f32[10,32], index: 10, kind: input, shape index: {}]
  %s11 = inlined_call_operand.vmem [shape: f32[10,32], index: 11, kind: input, shape index: {}]
  %s12 = inlined_call_operand.vmem [shape: f32[2,64,32], index: 12, kind: input, shape index: {}]
  %s13 = inlined_call_operand.vmem [shape: f32[2,1,32], index: 13, kind: input, shape index: {}]
  %s14 = inlined_call_operand.vmem [shape: f32[64,32], index: 14, kind: input, shape index: {}]
  %s15 = inlined_call_operand.vmem [shape: f32[1,32], index: 15, kind: input, shape index: {}]
  %s16 = inlined_call_operand.vmem [shape: f32[10,32], index: 16, kind: input, shape index: {}]
  %s17 = inlined_call_operand.vmem [shape: f32[10,32], index: 17, kind: input, shape index: {}]
  %s18 = inlined_call_operand.vmem [shape: f32[2,64,32], index: 18, kind: input, shape index: {}]
  %s19 = inlined_call_operand.vmem [shape: f32[2,1,32], index: 19, kind: input, shape index: {}]
  %s20 = inlined_call_operand.vmem [shape: f32[64,32], index: 20, kind: input, shape index: {}]
  %s21 = inlined_call_operand.vmem [shape: f32[1,32], index: 21, kind: input, shape index: {}]
  %s22 = inlined_call_operand.vmem [shape: f32[10,32], index: 22, kind: input, shape index: {}]
  %s23 = inlined_call_operand.vmem [shape: f32[10,32], index: 23, kind: input, shape index: {}]
  %s24 = inlined_call_operand.vmem [shape: f32[2,10,32], index: 24, kind: output, shape index: {0}]
  %s25 = inlined_call_operand.vmem [shape: f32[2,10,32], index: 25, kind: output, shape index: {1}]
  %s26 = inlined_call_operand.vmem [shape: f32[2,10,32], index: 26, kind: output, shape index: {2}]
  %27 = xla_tuple %s24, %s25, %s26
  %s28 = sld [smem:[#allocation0]]
  $region145: #{tpu_custom_call.1} parent=0
    _
  %s30 = ssub.s32 1, %s28
  %s31 = scalar_select 0, %s30, %s28
  loop: start=0, step=1, limit=4
  $region2: #{tpu_custom_call.1} parent=0 // loop_pre_header
    _
  $region3: #{tpu_custom_call.1} parent=0 // loop_header
    %s33 = sphi 0, %s37
    %p34 = scmp.ge.s32.totalorder %s33, 4
    %s43 = sphi 0, %s45
    %s46 = sphi 0, %s43
    %s47 = sphi 0, %s46
    %s63 = sphi 0, %s47
    %s69 = sphi 0, %s71
    %s72 = sphi 0, %s69
    %s73 = sphi 0, %s72
    %s89 = sphi 0, %s73
    %s95 = sphi 0, %s97
    %s98 = sphi 0, %s95
    %s99 = sphi 0, %s98
    %s115 = sphi 0, %s99
    %s121 = sphi 0, %s123
    %s124 = sphi 0, %s121
    %s125 = sphi 0, %s124
    %s141 = sphi 0, %s125
    %s147 = sphi 0, %s149
    %s150 = sphi 0, %s147
    %s151 = sphi 0, %s150
    %s167 = sphi 0, %s151
    %s173 = sphi 0, %s175
    %s176 = sphi 0, %s173
    %s177 = sphi 0, %s176
    %s193 = sphi 0, %s177
    %s197 = sphi 0, %s197
    %s199 = sphi 0, %s197
    %s200 = sphi 0, %s199
    %s214 = sphi 0, %s200
    %s218 = sphi 0, %s218
    %s220 = sphi 0, %s218
    %s221 = sphi 0, %s220
    %s235 = sphi 0, %s221
    %s239 = sphi 0, %s239
    %s241 = sphi 0, %s239
    %s242 = sphi 0, %s241
    %s256 = sphi 0, %s242
    %s260 = sphi 0, %s260
    %s262 = sphi 0, %s260
    %s263 = sphi 0, %s262
    %s277 = sphi 0, %s263
    %s281 = sphi 0, %s281
    %s283 = sphi 0, %s281
    %s284 = sphi 0, %s283
    %s298 = sphi 0, %s284
    %s302 = sphi 0, %s302
    %s304 = sphi 0, %s302
    %s305 = sphi 0, %s304
    %s319 = sphi 0, %s305
    %s323 = sphi 0, %s323
    %s325 = sphi 0, %s323
    %s326 = sphi 0, %s325
    %s340 = sphi 0, %s326
    %s344 = sphi 0, %s344
    %s346 = sphi 0, %s344
    %s347 = sphi 0, %s346
    %s361 = sphi 0, %s347
    %s365 = sphi 0, %s365
    %s367 = sphi 0, %s365
    %s368 = sphi 0, %s367
    %s382 = sphi 0, %s368
    %s386 = sphi 0, %s386
    %s388 = sphi 0, %s386
    %s389 = sphi 0, %s388
    %s403 = sphi 0, %s389
    %s407 = sphi 0, %s407
    %s409 = sphi 0, %s407
    %s410 = sphi 0, %s409
    %s424 = sphi 0, %s410
    %s428 = sphi 0, %s428
    %s430 = sphi 0, %s428
    %s431 = sphi 0, %s430
    %s445 = sphi 0, %s431
    %s449 = sphi 0, %s449
    %s451 = sphi 0, %s449
    %s452 = sphi 0, %s451
    %s466 = sphi 0, %s452
    %s470 = sphi 0, %s470
    %s472 = sphi 0, %s470
    %s473 = sphi 0, %s472
    %s487 = sphi 0, %s473
    %s491 = sphi 0, %s491
    %s493 = sphi 0, %s491
    %s494 = sphi 0, %s493
    %s508 = sphi 0, %s494
    %s512 = sphi 0, %s512
    %s514 = sphi 0, %s512
    %s515 = sphi 0, %s514
    %s529 = sphi 0, %s515
    %s533 = sphi 0, %s533
    %s535 = sphi 0, %s533
    %s536 = sphi 0, %s535
    %s550 = sphi 0, %s536
    %s554 = sphi 0, %s554
    %s556 = sphi 0, %s554
    %s557 = sphi 0, %s556
    %s571 = sphi 0, %s557
    %s577 = sphi 0, %s579
    %s580 = sphi 0, %s577
    %s581 = sphi 0, %s580
    %s597 = sphi 0, %s581
    %s603 = sphi 0, %s605
    %s606 = sphi 0, %s603
    %s607 = sphi 0, %s606
    %s623 = sphi 0, %s607
    %s629 = sphi 0, %s631
    %s632 = sphi 0, %s629
    %s633 = sphi 0, %s632
    %s649 = sphi 0, %s633
  $region4: #{tpu_custom_call.1} parent=0 // loop_header_branch
    %36 = sbr.rel (%p34) target = $region8
  $region5: #{tpu_custom_call.1} parent=0 // loop_body
    %s38 = ssub.s32 %s33, 1
    %s39 = ssub.s32 %s33, 2
    %s40 = sadd.s32 %s33, 1
    %s41 = ssub.s32 %s33, %s40
    %p42 = scmp.eq.s32.totalorder %s41, 0
    %s44 = sadd.s32 %s43, 1
    %s45 = scalar_select %p42, %s43, %s44
    %p48 = pneg %p42
    %p49 = scmp.eq.s32.totalorder %s33, 1
    %p50 = por %p48, %p49
    %p51 = scmp.ne.s32.totalorder %s43, %s46
    %p52 = scmp.eq.s32.totalorder %s33, 0
    %p53 = por %p51, %p52
    %p54 = scmp.ne.s32.totalorder %s43, %s46
    %p55 = scmp.eq.s32.totalorder %s38, 1
    %p56 = por %p54, %p55
    %p57 = scmp.ne.s32.totalorder %s46, %s47
    %p58 = scmp.eq.s32.totalorder %s38, 0
    %p59 = por %p57, %p58
    %p60 = scmp.ne.s32.totalorder %s46, %s47
    %p61 = scmp.eq.s32.totalorder %s39, 1
    %p62 = por %p60, %p61
    %p64 = scmp.ne.s32.totalorder %s47, %s63
    %p65 = scmp.eq.s32.totalorder %s39, 0
    %p66 = por %p64, %p65
    %s67 = ssub.s32 %s33, %s40
    %p68 = scmp.eq.s32.totalorder %s67, 0
    %s70 = sadd.s32 %s69, 1
    %s71 = scalar_select %p68, %s69, %s70
    %p74 = pneg %p68
    %p75 = scmp.eq.s32.totalorder %s33, 1
    %p76 = por %p74, %p75
    %p77 = scmp.ne.s32.totalorder %s69, %s72
    %p78 = scmp.eq.s32.totalorder %s33, 0
    %p79 = por %p77, %p78
    %p80 = scmp.ne.s32.totalorder %s69, %s72
    %p81 = scmp.eq.s32.totalorder %s38, 1
    %p82 = por %p80, %p81
    %p83 = scmp.ne.s32.totalorder %s72, %s73
    %p84 = scmp.eq.s32.totalorder %s38, 0
    %p85 = por %p83, %p84
    %p86 = scmp.ne.s32.totalorder %s72, %s73
    %p87 = scmp.eq.s32.totalorder %s39, 1
    %p88 = por %p86, %p87
    %p90 = scmp.ne.s32.totalorder %s73, %s89
    %p91 = scmp.eq.s32.totalorder %s39, 0
    %p92 = por %p90, %p91
    %s93 = ssub.s32 %s33, %s40
    %p94 = scmp.eq.s32.totalorder %s93, 0
    %s96 = sadd.s32 %s95, 1
    %s97 = scalar_select %p94, %s95, %s96
    %p100 = pneg %p94
    %p101 = scmp.eq.s32.totalorder %s33, 1
    %p102 = por %p100, %p101
    %p103 = scmp.ne.s32.totalorder %s95, %s98
    %p104 = scmp.eq.s32.totalorder %s33, 0
    %p105 = por %p103, %p104
    %p106 = scmp.ne.s32.totalorder %s95, %s98
    %p107 = scmp.eq.s32.totalorder %s38, 1
    %p108 = por %p106, %p107
    %p109 = scmp.ne.s32.totalorder %s98, %s99
    %p110 = scmp.eq.s32.totalorder %s38, 0
    %p111 = por %p109, %p110
    %p112 = scmp.ne.s32.totalorder %s98, %s99
    %p113 = scmp.eq.s32.totalorder %s39, 1
    %p114 = por %p112, %p113
    %p116 = scmp.ne.s32.totalorder %s99, %s115
    %p117 = scmp.eq.s32.totalorder %s39, 0
    %p118 = por %p116, %p117
    %s119 = ssub.s32 %s33, %s40
    %p120 = scmp.eq.s32.totalorder %s119, 0
    %s122 = sadd.s32 %s121, 1
    %s123 = scalar_select %p120, %s121, %s122
    %p126 = pneg %p120
    %p127 = scmp.eq.s32.totalorder %s33, 1
    %p128 = por %p126, %p127
    %p129 = scmp.ne.s32.totalorder %s121, %s124
    %p130 = scmp.eq.s32.totalorder %s33, 0
    %p131 = por %p129, %p130
    %p132 = scmp.ne.s32.totalorder %s121, %s124
    %p133 = scmp.eq.s32.totalorder %s38, 1
    %p134 = por %p132, %p133
    %p135 = scmp.ne.s32.totalorder %s124, %s125
    %p136 = scmp.eq.s32.totalorder %s38, 0
    %p137 = por %p135, %p136
    %p138 = scmp.ne.s32.totalorder %s124, %s125
    %p139 = scmp.eq.s32.totalorder %s39, 1
    %p140 = por %p138, %p139
    %p142 = scmp.ne.s32.totalorder %s125, %s141
    %p143 = scmp.eq.s32.totalorder %s39, 0
    %p144 = por %p142, %p143
    %s145 = ssub.s32 %s33, %s40
    %p146 = scmp.eq.s32.totalorder %s145, 0
    %s148 = sadd.s32 %s147, 1
    %s149 = scalar_select %p146, %s147, %s148
    %p152 = pneg %p146
    %p153 = scmp.eq.s32.totalorder %s33, 1
    %p154 = por %p152, %p153
    %p155 = scmp.ne.s32.totalorder %s147, %s150
    %p156 = scmp.eq.s32.totalorder %s33, 0
    %p157 = por %p155, %p156
    %p158 = scmp.ne.s32.totalorder %s147, %s150
    %p159 = scmp.eq.s32.totalorder %s38, 1
    %p160 = por %p158, %p159
    %p161 = scmp.ne.s32.totalorder %s150, %s151
    %p162 = scmp.eq.s32.totalorder %s38, 0
    %p163 = por %p161, %p162
    %p164 = scmp.ne.s32.totalorder %s150, %s151
    %p165 = scmp.eq.s32.totalorder %s39, 1
    %p166 = por %p164, %p165
    %p168 = scmp.ne.s32.totalorder %s151, %s167
    %p169 = scmp.eq.s32.totalorder %s39, 0
    %p170 = por %p168, %p169
    %s171 = ssub.s32 %s33, %s40
    %p172 = scmp.eq.s32.totalorder %s171, 0
    %s174 = sadd.s32 %s173, 1
    %s175 = scalar_select %p172, %s173, %s174
    %p178 = pneg %p172
    %p179 = scmp.eq.s32.totalorder %s33, 1
    %p180 = por %p178, %p179
    %p181 = scmp.ne.s32.totalorder %s173, %s176
    %p182 = scmp.eq.s32.totalorder %s33, 0
    %p183 = por %p181, %p182
    %p184 = scmp.ne.s32.totalorder %s173, %s176
    %p185 = scmp.eq.s32.totalorder %s38, 1
    %p186 = por %p184, %p185
    %p187 = scmp.ne.s32.totalorder %s176, %s177
    %p188 = scmp.eq.s32.totalorder %s38, 0
    %p189 = por %p187, %p188
    %p190 = scmp.ne.s32.totalorder %s176, %s177
    %p191 = scmp.eq.s32.totalorder %s39, 1
    %p192 = por %p190, %p191
    %p194 = scmp.ne.s32.totalorder %s177, %s193
    %p195 = scmp.eq.s32.totalorder %s39, 0
    %p196 = por %p194, %p195
    %s198 = sadd.s32 %s197, 1
    %p201 = scmp.eq.s32.totalorder %s33, 1
    %p202 = scmp.ne.s32.totalorder %s197, %s199
    %p203 = scmp.eq.s32.totalorder %s33, 0
    %p204 = por %p202, %p203
    %p205 = scmp.ne.s32.totalorder %s197, %s199
    %p206 = scmp.eq.s32.totalorder %s38, 1
    %p207 = por %p205, %p206
    %p208 = scmp.ne.s32.totalorder %s199, %s200
    %p209 = scmp.eq.s32.totalorder %s38, 0
    %p210 = por %p208, %p209
    %p211 = scmp.ne.s32.totalorder %s199, %s200
    %p212 = scmp.eq.s32.totalorder %s39, 1
    %p213 = por %p211, %p212
    %p215 = scmp.ne.s32.totalorder %s200, %s214
    %p216 = scmp.eq.s32.totalorder %s39, 0
    %p217 = por %p215, %p216
    %s219 = sadd.s32 %s218, 1
    %p222 = scmp.eq.s32.totalorder %s33, 1
    %p223 = scmp.ne.s32.totalorder %s218, %s220
    %p224 = scmp.eq.s32.totalorder %s33, 0
    %p225 = por %p223, %p224
    %p226 = scmp.ne.s32.totalorder %s218, %s220
    %p227 = scmp.eq.s32.totalorder %s38, 1
    %p228 = por %p226, %p227
    %p229 = scmp.ne.s32.totalorder %s220, %s221
    %p230 = scmp.eq.s32.totalorder %s38, 0
    %p231 = por %p229, %p230
    %p232 = scmp.ne.s32.totalorder %s220, %s221
    %p233 = scmp.eq.s32.totalorder %s39, 1
    %p234 = por %p232, %p233
    %p236 = scmp.ne.s32.totalorder %s221, %s235
    %p237 = scmp.eq.s32.totalorder %s39, 0
    %p238 = por %p236, %p237
    %s240 = sadd.s32 %s239, 1
    %p243 = scmp.eq.s32.totalorder %s33, 1
    %p244 = scmp.ne.s32.totalorder %s239, %s241
    %p245 = scmp.eq.s32.totalorder %s33, 0
    %p246 = por %p244, %p245
    %p247 = scmp.ne.s32.totalorder %s239, %s241
    %p248 = scmp.eq.s32.totalorder %s38, 1
    %p249 = por %p247, %p248
    %p250 = scmp.ne.s32.totalorder %s241, %s242
    %p251 = scmp.eq.s32.totalorder %s38, 0
    %p252 = por %p250, %p251
    %p253 = scmp.ne.s32.totalorder %s241, %s242
    %p254 = scmp.eq.s32.totalorder %s39, 1
    %p255 = por %p253, %p254
    %p257 = scmp.ne.s32.totalorder %s242, %s256
    %p258 = scmp.eq.s32.totalorder %s39, 0
    %p259 = por %p257, %p258
    %s261 = sadd.s32 %s260, 1
    %p264 = scmp.eq.s32.totalorder %s33, 1
    %p265 = scmp.ne.s32.totalorder %s260, %s262
    %p266 = scmp.eq.s32.totalorder %s33, 0
    %p267 = por %p265, %p266
    %p268 = scmp.ne.s32.totalorder %s260, %s262
    %p269 = scmp.eq.s32.totalorder %s38, 1
    %p270 = por %p268, %p269
    %p271 = scmp.ne.s32.totalorder %s262, %s263
    %p272 = scmp.eq.s32.totalorder %s38, 0
    %p273 = por %p271, %p272
    %p274 = scmp.ne.s32.totalorder %s262, %s263
    %p275 = scmp.eq.s32.totalorder %s39, 1
    %p276 = por %p274, %p275
    %p278 = scmp.ne.s32.totalorder %s263, %s277
    %p279 = scmp.eq.s32.totalorder %s39, 0
    %p280 = por %p278, %p279
    %s282 = sadd.s32 %s281, 1
    %p285 = scmp.eq.s32.totalorder %s33, 1
    %p286 = scmp.ne.s32.totalorder %s281, %s283
    %p287 = scmp.eq.s32.totalorder %s33, 0
    %p288 = por %p286, %p287
    %p289 = scmp.ne.s32.totalorder %s281, %s283
    %p290 = scmp.eq.s32.totalorder %s38, 1
    %p291 = por %p289, %p290
    %p292 = scmp.ne.s32.totalorder %s283, %s284
    %p293 = scmp.eq.s32.totalorder %s38, 0
    %p294 = por %p292, %p293
    %p295 = scmp.ne.s32.totalorder %s283, %s284
    %p296 = scmp.eq.s32.totalorder %s39, 1
    %p297 = por %p295, %p296
    %p299 = scmp.ne.s32.totalorder %s284, %s298
    %p300 = scmp.eq.s32.totalorder %s39, 0
    %p301 = por %p299, %p300
    %s303 = sadd.s32 %s302, 1
    %p306 = scmp.eq.s32.totalorder %s33, 1
    %p307 = scmp.ne.s32.totalorder %s302, %s304
    %p308 = scmp.eq.s32.totalorder %s33, 0
    %p309 = por %p307, %p308
    %p310 = scmp.ne.s32.totalorder %s302, %s304
    %p311 = scmp.eq.s32.totalorder %s38, 1
    %p312 = por %p310, %p311
    %p313 = scmp.ne.s32.totalorder %s304, %s305
    %p314 = scmp.eq.s32.totalorder %s38, 0
    %p315 = por %p313, %p314
    %p316 = scmp.ne.s32.totalorder %s304, %s305
    %p317 = scmp.eq.s32.totalorder %s39, 1
    %p318 = por %p316, %p317
    %p320 = scmp.ne.s32.totalorder %s305, %s319
    %p321 = scmp.eq.s32.totalorder %s39, 0
    %p322 = por %p320, %p321
    %s324 = sadd.s32 %s323, 1
    %p327 = scmp.eq.s32.totalorder %s33, 1
    %p328 = scmp.ne.s32.totalorder %s323, %s325
    %p329 = scmp.eq.s32.totalorder %s33, 0
    %p330 = por %p328, %p329
    %p331 = scmp.ne.s32.totalorder %s323, %s325
    %p332 = scmp.eq.s32.totalorder %s38, 1
    %p333 = por %p331, %p332
    %p334 = scmp.ne.s32.totalorder %s325, %s326
    %p335 = scmp.eq.s32.totalorder %s38, 0
    %p336 = por %p334, %p335
    %p337 = scmp.ne.s32.totalorder %s325, %s326
    %p338 = scmp.eq.s32.totalorder %s39, 1
    %p339 = por %p337, %p338
    %p341 = scmp.ne.s32.totalorder %s326, %s340
    %p342 = scmp.eq.s32.totalorder %s39, 0
    %p343 = por %p341, %p342
    %s345 = sadd.s32 %s344, 1
    %p348 = scmp.eq.s32.totalorder %s33, 1
    %p349 = scmp.ne.s32.totalorder %s344, %s346
    %p350 = scmp.eq.s32.totalorder %s33, 0
    %p351 = por %p349, %p350
    %p352 = scmp.ne.s32.totalorder %s344, %s346
    %p353 = scmp.eq.s32.totalorder %s38, 1
    %p354 = por %p352, %p353
    %p355 = scmp.ne.s32.totalorder %s346, %s347
    %p356 = scmp.eq.s32.totalorder %s38, 0
    %p357 = por %p355, %p356
    %p358 = scmp.ne.s32.totalorder %s346, %s347
    %p359 = scmp.eq.s32.totalorder %s39, 1
    %p360 = por %p358, %p359
    %p362 = scmp.ne.s32.totalorder %s347, %s361
    %p363 = scmp.eq.s32.totalorder %s39, 0
    %p364 = por %p362, %p363
    %s366 = sadd.s32 %s365, 1
    %p369 = scmp.eq.s32.totalorder %s33, 1
    %p370 = scmp.ne.s32.totalorder %s365, %s367
    %p371 = scmp.eq.s32.totalorder %s33, 0
    %p372 = por %p370, %p371
    %p373 = scmp.ne.s32.totalorder %s365, %s367
    %p374 = scmp.eq.s32.totalorder %s38, 1
    %p375 = por %p373, %p374
    %p376 = scmp.ne.s32.totalorder %s367, %s368
    %p377 = scmp.eq.s32.totalorder %s38, 0
    %p378 = por %p376, %p377
    %p379 = scmp.ne.s32.totalorder %s367, %s368
    %p380 = scmp.eq.s32.totalorder %s39, 1
    %p381 = por %p379, %p380
    %p383 = scmp.ne.s32.totalorder %s368, %s382
    %p384 = scmp.eq.s32.totalorder %s39, 0
    %p385 = por %p383, %p384
    %s387 = sadd.s32 %s386, 1
    %p390 = scmp.eq.s32.totalorder %s33, 1
    %p391 = scmp.ne.s32.totalorder %s386, %s388
    %p392 = scmp.eq.s32.totalorder %s33, 0
    %p393 = por %p391, %p392
    %p394 = scmp.ne.s32.totalorder %s386, %s388
    %p395 = scmp.eq.s32.totalorder %s38, 1
    %p396 = por %p394, %p395
    %p397 = scmp.ne.s32.totalorder %s388, %s389
    %p398 = scmp.eq.s32.totalorder %s38, 0
    %p399 = por %p397, %p398
    %p400 = scmp.ne.s32.totalorder %s388, %s389
    %p401 = scmp.eq.s32.totalorder %s39, 1
    %p402 = por %p400, %p401
    %p404 = scmp.ne.s32.totalorder %s389, %s403
    %p405 = scmp.eq.s32.totalorder %s39, 0
    %p406 = por %p404, %p405
    %s408 = sadd.s32 %s407, 1
    %p411 = scmp.eq.s32.totalorder %s33, 1
    %p412 = scmp.ne.s32.totalorder %s407, %s409
    %p413 = scmp.eq.s32.totalorder %s33, 0
    %p414 = por %p412, %p413
    %p415 = scmp.ne.s32.totalorder %s407, %s409
    %p416 = scmp.eq.s32.totalorder %s38, 1
    %p417 = por %p415, %p416
    %p418 = scmp.ne.s32.totalorder %s409, %s410
    %p419 = scmp.eq.s32.totalorder %s38, 0
    %p420 = por %p418, %p419
    %p421 = scmp.ne.s32.totalorder %s409, %s410
    %p422 = scmp.eq.s32.totalorder %s39, 1
    %p423 = por %p421, %p422
    %p425 = scmp.ne.s32.totalorder %s410, %s424
    %p426 = scmp.eq.s32.totalorder %s39, 0
    %p427 = por %p425, %p426
    %s429 = sadd.s32 %s428, 1
    %p432 = scmp.eq.s32.totalorder %s33, 1
    %p433 = scmp.ne.s32.totalorder %s428, %s430
    %p434 = scmp.eq.s32.totalorder %s33, 0
    %p435 = por %p433, %p434
    %p436 = scmp.ne.s32.totalorder %s428, %s430
    %p437 = scmp.eq.s32.totalorder %s38, 1
    %p438 = por %p436, %p437
    %p439 = scmp.ne.s32.totalorder %s430, %s431
    %p440 = scmp.eq.s32.totalorder %s38, 0
    %p441 = por %p439, %p440
    %p442 = scmp.ne.s32.totalorder %s430, %s431
    %p443 = scmp.eq.s32.totalorder %s39, 1
    %p444 = por %p442, %p443
    %p446 = scmp.ne.s32.totalorder %s431, %s445
    %p447 = scmp.eq.s32.totalorder %s39, 0
    %p448 = por %p446, %p447
    %s450 = sadd.s32 %s449, 1
    %p453 = scmp.eq.s32.totalorder %s33, 1
    %p454 = scmp.ne.s32.totalorder %s449, %s451
    %p455 = scmp.eq.s32.totalorder %s33, 0
    %p456 = por %p454, %p455
    %p457 = scmp.ne.s32.totalorder %s449, %s451
    %p458 = scmp.eq.s32.totalorder %s38, 1
    %p459 = por %p457, %p458
    %p460 = scmp.ne.s32.totalorder %s451, %s452
    %p461 = scmp.eq.s32.totalorder %s38, 0
    %p462 = por %p460, %p461
    %p463 = scmp.ne.s32.totalorder %s451, %s452
    %p464 = scmp.eq.s32.totalorder %s39, 1
    %p465 = por %p463, %p464
    %p467 = scmp.ne.s32.totalorder %s452, %s466
    %p468 = scmp.eq.s32.totalorder %s39, 0
    %p469 = por %p467, %p468
    %s471 = sadd.s32 %s470, 1
    %p474 = scmp.eq.s32.totalorder %s33, 1
    %p475 = scmp.ne.s32.totalorder %s470, %s472
    %p476 = scmp.eq.s32.totalorder %s33, 0
    %p477 = por %p475, %p476
    %p478 = scmp.ne.s32.totalorder %s470, %s472
    %p479 = scmp.eq.s32.totalorder %s38, 1
    %p480 = por %p478, %p479
    %p481 = scmp.ne.s32.totalorder %s472, %s473
    %p482 = scmp.eq.s32.totalorder %s38, 0
    %p483 = por %p481, %p482
    %p484 = scmp.ne.s32.totalorder %s472, %s473
    %p485 = scmp.eq.s32.totalorder %s39, 1
    %p486 = por %p484, %p485
    %p488 = scmp.ne.s32.totalorder %s473, %s487
    %p489 = scmp.eq.s32.totalorder %s39, 0
    %p490 = por %p488, %p489
    %s492 = sadd.s32 %s491, 1
    %p495 = scmp.eq.s32.totalorder %s33, 1
    %p496 = scmp.ne.s32.totalorder %s491, %s493
    %p497 = scmp.eq.s32.totalorder %s33, 0
    %p498 = por %p496, %p497
    %p499 = scmp.ne.s32.totalorder %s491, %s493
    %p500 = scmp.eq.s32.totalorder %s38, 1
    %p501 = por %p499, %p500
    %p502 = scmp.ne.s32.totalorder %s493, %s494
    %p503 = scmp.eq.s32.totalorder %s38, 0
    %p504 = por %p502, %p503
    %p505 = scmp.ne.s32.totalorder %s493, %s494
    %p506 = scmp.eq.s32.totalorder %s39, 1
    %p507 = por %p505, %p506
    %p509 = scmp.ne.s32.totalorder %s494, %s508
    %p510 = scmp.eq.s32.totalorder %s39, 0
    %p511 = por %p509, %p510
    %s513 = sadd.s32 %s512, 1
    %p516 = scmp.eq.s32.totalorder %s33, 1
    %p517 = scmp.ne.s32.totalorder %s512, %s514
    %p518 = scmp.eq.s32.totalorder %s33, 0
    %p519 = por %p517, %p518
    %p520 = scmp.ne.s32.totalorder %s512, %s514
    %p521 = scmp.eq.s32.totalorder %s38, 1
    %p522 = por %p520, %p521
    %p523 = scmp.ne.s32.totalorder %s514, %s515
    %p524 = scmp.eq.s32.totalorder %s38, 0
    %p525 = por %p523, %p524
    %p526 = scmp.ne.s32.totalorder %s514, %s515
    %p527 = scmp.eq.s32.totalorder %s39, 1
    %p528 = por %p526, %p527
    %p530 = scmp.ne.s32.totalorder %s515, %s529
    %p531 = scmp.eq.s32.totalorder %s39, 0
    %p532 = por %p530, %p531
    %s534 = sadd.s32 %s533, 1
    %p537 = scmp.eq.s32.totalorder %s33, 1
    %p538 = scmp.ne.s32.totalorder %s533, %s535
    %p539 = scmp.eq.s32.totalorder %s33, 0
    %p540 = por %p538, %p539
    %p541 = scmp.ne.s32.totalorder %s533, %s535
    %p542 = scmp.eq.s32.totalorder %s38, 1
    %p543 = por %p541, %p542
    %p544 = scmp.ne.s32.totalorder %s535, %s536
    %p545 = scmp.eq.s32.totalorder %s38, 0
    %p546 = por %p544, %p545
    %p547 = scmp.ne.s32.totalorder %s535, %s536
    %p548 = scmp.eq.s32.totalorder %s39, 1
    %p549 = por %p547, %p548
    %p551 = scmp.ne.s32.totalorder %s536, %s550
    %p552 = scmp.eq.s32.totalorder %s39, 0
    %p553 = por %p551, %p552
    %s555 = sadd.s32 %s554, 1
    %p558 = scmp.eq.s32.totalorder %s33, 1
    %p559 = scmp.ne.s32.totalorder %s554, %s556
    %p560 = scmp.eq.s32.totalorder %s33, 0
    %p561 = por %p559, %p560
    %p562 = scmp.ne.s32.totalorder %s554, %s556
    %p563 = scmp.eq.s32.totalorder %s38, 1
    %p564 = por %p562, %p563
    %p565 = scmp.ne.s32.totalorder %s556, %s557
    %p566 = scmp.eq.s32.totalorder %s38, 0
    %p567 = por %p565, %p566
    %p568 = scmp.ne.s32.totalorder %s556, %s557
    %p569 = scmp.eq.s32.totalorder %s39, 1
    %p570 = por %p568, %p569
    %p572 = scmp.ne.s32.totalorder %s557, %s571
    %p573 = scmp.eq.s32.totalorder %s39, 0
    %p574 = por %p572, %p573
    %s575 = ssub.s32 %s33, %s40
    %p576 = scmp.eq.s32.totalorder %s575, 0
    %s578 = sadd.s32 %s577, 1
    %s579 = scalar_select %p576, %s577, %s578
    %p582 = pneg %p576
    %p583 = scmp.eq.s32.totalorder %s33, 1
    %p584 = por %p582, %p583
    %p585 = scmp.ne.s32.totalorder %s577, %s580
    %p586 = scmp.eq.s32.totalorder %s33, 0
    %p587 = por %p585, %p586
    %p588 = scmp.ne.s32.totalorder %s577, %s580
    %p589 = scmp.eq.s32.totalorder %s38, 1
    %p590 = por %p588, %p589
    %p591 = scmp.ne.s32.totalorder %s580, %s581
    %p592 = scmp.eq.s32.totalorder %s38, 0
    %p593 = por %p591, %p592
    %p594 = scmp.ne.s32.totalorder %s580, %s581
    %p595 = scmp.eq.s32.totalorder %s39, 1
    %p596 = por %p594, %p595
    %p598 = scmp.ne.s32.totalorder %s581, %s597
    %p599 = scmp.eq.s32.totalorder %s39, 0
    %p600 = por %p598, %p599
    %s601 = ssub.s32 %s33, %s40
    %p602 = scmp.eq.s32.totalorder %s601, 0
    %s604 = sadd.s32 %s603, 1
    %s605 = scalar_select %p602, %s603, %s604
    %p608 = pneg %p602
    %p609 = scmp.eq.s32.totalorder %s33, 1
    %p610 = por %p608, %p609
    %p611 = scmp.ne.s32.totalorder %s603, %s606
    %p612 = scmp.eq.s32.totalorder %s33, 0
    %p613 = por %p611, %p612
    %p614 = scmp.ne.s32.totalorder %s603, %s606
    %p615 = scmp.eq.s32.totalorder %s38, 1
    %p616 = por %p614, %p615
    %p617 = scmp.ne.s32.totalorder %s606, %s607
    %p618 = scmp.eq.s32.totalorder %s38, 0
    %p619 = por %p617, %p618
    %p620 = scmp.ne.s32.totalorder %s606, %s607
    %p621 = scmp.eq.s32.totalorder %s39, 1
    %p622 = por %p620, %p621
    %p624 = scmp.ne.s32.totalorder %s607, %s623
    %p625 = scmp.eq.s32.totalorder %s39, 0
    %p626 = por %p624, %p625
    %s627 = ssub.s32 %s33, %s40
    %p628 = scmp.eq.s32.totalorder %s627, 0
    %s630 = sadd.s32 %s629, 1
    %s631 = scalar_select %p628, %s629, %s630
    %p634 = pneg %p628
    %p635 = scmp.eq.s32.totalorder %s33, 1
    %p636 = por %p634, %p635
    %p637 = scmp.ne.s32.totalorder %s629, %s632
    %p638 = scmp.eq.s32.totalorder %s33, 0
    %p639 = por %p637, %p638
    %p640 = scmp.ne.s32.totalorder %s629, %s632
    %p641 = scmp.eq.s32.totalorder %s38, 1
    %p642 = por %p640, %p641
    %p643 = scmp.ne.s32.totalorder %s632, %s633
    %p644 = scmp.eq.s32.totalorder %s38, 0
    %p645 = por %p643, %p644
    %p646 = scmp.ne.s32.totalorder %s632, %s633
    %p647 = scmp.eq.s32.totalorder %s39, 1
    %p648 = por %p646, %p647
    %p650 = scmp.ne.s32.totalorder %s633, %s649
    %p651 = scmp.eq.s32.totalorder %s39, 0
    %p652 = por %p650, %p651
    %p653 = scmp.le.s32.totalorder 1, %s33
    %p654 = scmp.lt.s32.totalorder %s33, 3
    %p655 = pnand %p653, %p654
    %p656 = pneg %p655
    // Predicated region
    $region9: #{tpu_custom_call.1} parent=5 // pred_check
      _
    $region10: #{tpu_custom_call.1} parent=5 // pred_check_branch
      %658 = sbr.rel (%p655) target = $region12
    $region11: #{tpu_custom_call.1} parent=5 // pred_region
      %s659 = ssub.s32 %s33, 1
      // Predicated region
      $region13: #{tpu_custom_call.1} parent=11 // pred_check
        %p660 = pneg %p210
      $region14: #{tpu_custom_call.1} parent=11 // pred_check_branch
        %662 = sbr.rel (%p660) target = $region16
      $region15: #{tpu_custom_call.1} parent=11 // pred_region
        _
      $region16: #{tpu_custom_call.1} parent=11 // pred_fallthru
        _
      // Predicated region
      $region17: #{tpu_custom_call.1} parent=11 // pred_check
        %p663 = pneg %p231
      $region18: #{tpu_custom_call.1} parent=11 // pred_check_branch
        %665 = sbr.rel (%p663) target = $region20
      $region19: #{tpu_custom_call.1} parent=11 // pred_region
        _
      $region20: #{tpu_custom_call.1} parent=11 // pred_fallthru
        _
      // Predicated region
      $region21: #{tpu_custom_call.1} parent=11 // pred_check
        %p666 = pneg %p252
      $region22: #{tpu_custom_call.1} parent=11 // pred_check_branch
        %668 = sbr.rel (%p666) target = $region24
      $region23: #{tpu_custom_call.1} parent=11 // pred_region
        _
      $region24: #{tpu_custom_call.1} parent=11 // pred_fallthru
        _
      // Predicated region
      $region25: #{tpu_custom_call.1} parent=11 // pred_check
        %p669 = pneg %p273
      $region26: #{tpu_custom_call.1} parent=11 // pred_check_branch
        %671 = sbr.rel (%p669) target = $region28
      $region27: #{tpu_custom_call.1} parent=11 // pred_region
        _
      $region28: #{tpu_custom_call.1} parent=11 // pred_fallthru
        _
      // Predicated region
      $region29: #{tpu_custom_call.1} parent=11 // pred_check
        %p672 = pneg %p294
      $region30: #{tpu_custom_call.1} parent=11 // pred_check_branch
        %674 = sbr.rel (%p672) target = $region32
      $region31: #{tpu_custom_call.1} parent=11 // pred_region
        _
      $region32: #{tpu_custom_call.1} parent=11 // pred_fallthru
        _
      // Predicated region
      $region33: #{tpu_custom_call.1} parent=11 // pred_check
        %p675 = pneg %p315
      $region34: #{tpu_custom_call.1} parent=11 // pred_check_branch
        %677 = sbr.rel (%p675) target = $region36
      $region35: #{tpu_custom_call.1} parent=11 // pred_region
        _
      $region36: #{tpu_custom_call.1} parent=11 // pred_fallthru
        _
      // Predicated region
      $region37: #{tpu_custom_call.1} parent=11 // pred_check
        %p678 = pneg %p336
      $region38: #{tpu_custom_call.1} parent=11 // pred_check_branch
        %680 = sbr.rel (%p678) target = $region40
      $region39: #{tpu_custom_call.1} parent=11 // pred_region
        _
      $region40: #{tpu_custom_call.1} parent=11 // pred_fallthru
        _
      // Predicated region
      $region41: #{tpu_custom_call.1} parent=11 // pred_check
        %p681 = pneg %p357
      $region42: #{tpu_custom_call.1} parent=11 // pred_check_branch
        %683 = sbr.rel (%p681) target = $region44
      $region43: #{tpu_custom_call.1} parent=11 // pred_region
        _
      $region44: #{tpu_custom_call.1} parent=11 // pred_fallthru
        _
      // Predicated region
      $region45: #{tpu_custom_call.1} parent=11 // pred_check
        %p684 = pneg %p378
      $region46: #{tpu_custom_call.1} parent=11 // pred_check_branch
        %686 = sbr.rel (%p684) target = $region48
      $region47: #{tpu_custom_call.1} parent=11 // pred_region
        _
      $region48: #{tpu_custom_call.1} parent=11 // pred_fallthru
        _
      // Predicated region
      $region49: #{tpu_custom_call.1} parent=11 // pred_check
        %p687 = pneg %p399
      $region50: #{tpu_custom_call.1} parent=11 // pred_check_branch
        %689 = sbr.rel (%p687) target = $region52
      $region51: #{tpu_custom_call.1} parent=11 // pred_region
        _
      $region52: #{tpu_custom_call.1} parent=11 // pred_fallthru
        _
      // Predicated region
      $region53: #{tpu_custom_call.1} parent=11 // pred_check
        %p690 = pneg %p420
      $region54: #{tpu_custom_call.1} parent=11 // pred_check_branch
        %692 = sbr.rel (%p690) target = $region56
      $region55: #{tpu_custom_call.1} parent=11 // pred_region
        _
      $region56: #{tpu_custom_call.1} parent=11 // pred_fallthru
        _
      // Predicated region
      $region57: #{tpu_custom_call.1} parent=11 // pred_check
        %p693 = pneg %p441
      $region58: #{tpu_custom_call.1} parent=11 // pred_check_branch
        %695 = sbr.rel (%p693) target = $region60
      $region59: #{tpu_custom_call.1} parent=11 // pred_region
        _
      $region60: #{tpu_custom_call.1} parent=11 // pred_fallthru
        _
      // Predicated region
      $region61: #{tpu_custom_call.1} parent=11 // pred_check
        %p696 = pneg %p462
      $region62: #{tpu_custom_call.1} parent=11 // pred_check_branch
        %698 = sbr.rel (%p696) target = $region64
      $region63: #{tpu_custom_call.1} parent=11 // pred_region
        _
      $region64: #{tpu_custom_call.1} parent=11 // pred_fallthru
        _
      // Predicated region
      $region65: #{tpu_custom_call.1} parent=11 // pred_check
        %p699 = pneg %p483
      $region66: #{tpu_custom_call.1} parent=11 // pred_check_branch
        %701 = sbr.rel (%p699) target = $region68
      $region67: #{tpu_custom_call.1} parent=11 // pred_region
        _
      $region68: #{tpu_custom_call.1} parent=11 // pred_fallthru
        _
      // Predicated region
      $region69: #{tpu_custom_call.1} parent=11 // pred_check
        %p702 = pneg %p504
      $region70: #{tpu_custom_call.1} parent=11 // pred_check_branch
        %704 = sbr.rel (%p702) target = $region72
      $region71: #{tpu_custom_call.1} parent=11 // pred_region
        _
      $region72: #{tpu_custom_call.1} parent=11 // pred_fallthru
        _
      // Predicated region
      $region73: #{tpu_custom_call.1} parent=11 // pred_check
        %p705 = pneg %p525
      $region74: #{tpu_custom_call.1} parent=11 // pred_check_branch
        %707 = sbr.rel (%p705) target = $region76
      $region75: #{tpu_custom_call.1} parent=11 // pred_region
        _
      $region76: #{tpu_custom_call.1} parent=11 // pred_fallthru
        _
      // Predicated region
      $region77: #{tpu_custom_call.1} parent=11 // pred_check
        %p708 = pneg %p546
      $region78: #{tpu_custom_call.1} parent=11 // pred_check_branch
        %710 = sbr.rel (%p708) target = $region80
      $region79: #{tpu_custom_call.1} parent=11 // pred_region
        _
      $region80: #{tpu_custom_call.1} parent=11 // pred_fallthru
        _
      // Predicated region
      $region81: #{tpu_custom_call.1} parent=11 // pred_check
        %p711 = pneg %p567
      $region82: #{tpu_custom_call.1} parent=11 // pred_check_branch
        %713 = sbr.rel (%p711) target = $region84
      $region83: #{tpu_custom_call.1} parent=11 // pred_region
        _
      $region84: #{tpu_custom_call.1} parent=11 // pred_fallthru
        _
    $region12: #{tpu_custom_call.1} parent=5 // pred_fallthru
      _
    %p714 = scmp.lt.s32.totalorder %s33, 2
    // Predicated region
    $region85: #{tpu_custom_call.1} parent=5 // pred_check
      %p715 = pneg %p714
    $region86: #{tpu_custom_call.1} parent=5 // pred_check_branch
      %717 = sbr.rel (%p715) target = $region88
    $region87: #{tpu_custom_call.1} parent=5 // pred_region
      // Predicated region
      $region89: #{tpu_custom_call.1} parent=87 // pred_check
        %p718 = pneg %p53
      $region90: #{tpu_custom_call.1} parent=87 // pred_check_branch
        %720 = sbr.rel (%p718) target = $region92
      $region91: #{tpu_custom_call.1} parent=87 // pred_region
        %p721 = scmp.lt.s32.totalorder %s33, 1
        %s722 = scalar_select %p721, %s33, 1
        %s723 = smul.addr %s722, 2
        %s724 = smul.addr %s723, 8
        %s725 = scalar_lea.vmem %s0, %s724
      $region92: #{tpu_custom_call.1} parent=87 // pred_fallthru
        _
      // Predicated region
      $region93: #{tpu_custom_call.1} parent=87 // pred_check
        %p726 = pneg %p79
      $region94: #{tpu_custom_call.1} parent=87 // pred_check_branch
        %728 = sbr.rel (%p726) target = $region96
      $region95: #{tpu_custom_call.1} parent=87 // pred_region
        %p729 = scmp.lt.s32.totalorder %s33, 1
        %s730 = scalar_select %p729, %s33, 1
        %s731 = smul.addr %s730, 2
        %s732 = smul.addr %s731, 8
        %s733 = scalar_lea.vmem %s1, %s732
      $region96: #{tpu_custom_call.1} parent=87 // pred_fallthru
        _
      // Predicated region
      $region97: #{tpu_custom_call.1} parent=87 // pred_check
        %p734 = pneg %p105
      $region98: #{tpu_custom_call.1} parent=87 // pred_check_branch
        %736 = sbr.rel (%p734) target = $region100
      $region99: #{tpu_custom_call.1} parent=87 // pred_region
        %p737 = scmp.lt.s32.totalorder %s33, 1
        %s738 = scalar_select %p737, %s33, 1
        %s739 = smul.addr %s738, 2
        %s740 = smul.addr %s739, 8
        %s741 = scalar_lea.vmem %s2, %s740
      $region100: #{tpu_custom_call.1} parent=87 // pred_fallthru
        _
      // Predicated region
      $region101: #{tpu_custom_call.1} parent=87 // pred_check
        %p742 = pneg %p131
      $region102: #{tpu_custom_call.1} parent=87 // pred_check_branch
        %744 = sbr.rel (%p742) target = $region104
      $region103: #{tpu_custom_call.1} parent=87 // pred_region
        %p745 = scmp.lt.s32.totalorder %s33, 1
        %s746 = scalar_select %p745, %s33, 1
        %s747 = smul.addr %s746, 2
        %s748 = smul.addr %s747, 8
        %s749 = scalar_lea.vmem %s3, %s748
      $region104: #{tpu_custom_call.1} parent=87 // pred_fallthru
        _
      // Predicated region
      $region105: #{tpu_custom_call.1} parent=87 // pred_check
        %p750 = pneg %p157
      $region106: #{tpu_custom_call.1} parent=87 // pred_check_branch
        %752 = sbr.rel (%p750) target = $region108
      $region107: #{tpu_custom_call.1} parent=87 // pred_region
        %p753 = scmp.lt.s32.totalorder %s33, 1
        %s754 = scalar_select %p753, %s33, 1
        %s755 = smul.addr %s754, 2
        %s756 = smul.addr %s755, 8
        %s757 = scalar_lea.vmem %s4, %s756
      $region108: #{tpu_custom_call.1} parent=87 // pred_fallthru
        _
      // Predicated region
      $region109: #{tpu_custom_call.1} parent=87 // pred_check
        %p758 = pneg %p183
      $region110: #{tpu_custom_call.1} parent=87 // pred_check_branch
        %760 = sbr.rel (%p758) target = $region112
      $region111: #{tpu_custom_call.1} parent=87 // pred_region
        %p761 = scmp.lt.s32.totalorder %s33, 1
        %s762 = scalar_select %p761, %s33, 1
        %s763 = smul.addr %s762, 2
        %s764 = smul.addr %s763, 8
        %s765 = scalar_lea.vmem %s5, %s764
      $region112: #{tpu_custom_call.1} parent=87 // pred_fallthru
        _
    $region88: #{tpu_custom_call.1} parent=5 // pred_fallthru
      _
    %p766 = scmp.le.s32.totalorder 1, %s33
    %p767 = scmp.lt.s32.totalorder %s33, 3
    %p768 = pnand %p766, %p767
    %p769 = pneg %p768
    // Predicated region
    $region113: #{tpu_custom_call.1} parent=5 // pred_check
      _
    $region114: #{tpu_custom_call.1} parent=5 // pred_check_branch
      %771 = sbr.rel (%p768) target = $region116
    $region115: #{tpu_custom_call.1} parent=5 // pred_region
      %s772 = ssub.s32 %s33, 1
      %p773 = scmp.lt.s32.totalorder %s38, 1
      %s774 = scalar_select %p773, %s38, 1
      %s775 = smul.addr %s774, 2
      %s776 = smul.addr %s775, 8
      %s777 = scalar_lea.vmem %s0, %s776
      %p778 = pneg %p59
      %p779 = pneg %p56
      %p780 = scmp.lt.s32.totalorder %s38, 1
      %s781 = scalar_select %p780, %s38, 1
      %s782 = smul.addr %s781, 2
      %s783 = smul.addr %s782, 8
      %s784 = scalar_lea.vmem %s1, %s783
      %p785 = pneg %p85
      %p786 = pneg %p82
      %p787 = scmp.lt.s32.totalorder %s38, 1
      %s788 = scalar_select %p787, %s38, 1
      %s789 = smul.addr %s788, 2
      %s790 = smul.addr %s789, 8
      %s791 = scalar_lea.vmem %s2, %s790
      %p792 = pneg %p111
      %p793 = pneg %p108
      %p794 = scmp.lt.s32.totalorder %s38, 1
      %s795 = scalar_select %p794, %s38, 1
      %s796 = smul.addr %s795, 2
      %s797 = smul.addr %s796, 8
      %s798 = scalar_lea.vmem %s3, %s797
      %p799 = pneg %p137
      %p800 = pneg %p134
      %p801 = scmp.lt.s32.totalorder %s38, 1
      %s802 = scalar_select %p801, %s38, 1
      %s803 = smul.addr %s802, 2
      %s804 = smul.addr %s803, 8
      %s805 = scalar_lea.vmem %s4, %s804
      %p806 = pneg %p163
      %p807 = pneg %p160
      %p808 = scmp.lt.s32.totalorder %s38, 1
      %s809 = scalar_select %p808, %s38, 1
      %s810 = smul.addr %s809, 2
      %s811 = smul.addr %s810, 8
      %s812 = scalar_lea.vmem %s5, %s811
      %p813 = pneg %p189
      %p814 = pneg %p186
      %p815 = pneg %p210
      %p816 = pneg %p207
      %p817 = pneg %p231
      %p818 = pneg %p228
      %p819 = pneg %p252
      %p820 = pneg %p249
      %p821 = pneg %p273
      %p822 = pneg %p270
      %p823 = pneg %p294
      %p824 = pneg %p291
      %p825 = pneg %p315
      %p826 = pneg %p312
      %p827 = pneg %p336
      %p828 = pneg %p333
      %p829 = pneg %p357
      %p830 = pneg %p354
      %p831 = pneg %p378
      %p832 = pneg %p375
      %p833 = pneg %p399
      %p834 = pneg %p396
      %p835 = pneg %p420
      %p836 = pneg %p417
      %p837 = pneg %p441
      %p838 = pneg %p438
      %p839 = pneg %p462
      %p840 = pneg %p459
      %p841 = pneg %p483
      %p842 = pneg %p480
      %p843 = pneg %p504
      %p844 = pneg %p501
      %p845 = pneg %p525
      %p846 = pneg %p522
      %p847 = pneg %p546
      %p848 = pneg %p543
      %p849 = pneg %p567
      %p850 = pneg %p564
      %p851 = pneg %p593
      %p852 = pneg %p590
      %p853 = scmp.lt.s32.totalorder %s38, 1
      %s854 = scalar_select %p853, %s38, 1
      %s855 = smul.addr %s854, 2
      %s856 = smul.addr %s855, 8
      %s857 = scalar_lea.vmem %s24, %s856
      %p858 = pneg %p619
      %p859 = pneg %p616
      %p860 = scmp.lt.s32.totalorder %s38, 1
      %s861 = scalar_select %p860, %s38, 1
      %s862 = smul.addr %s861, 2
      %s863 = smul.addr %s862, 8
      %s864 = scalar_lea.vmem %s25, %s863
      %p865 = pneg %p645
      %p866 = pneg %p642
      %p867 = scmp.lt.s32.totalorder %s38, 1
      %s868 = scalar_select %p867, %s38, 1
      %s869 = smul.addr %s868, 2
      %s870 = smul.addr %s869, 8
      %s871 = scalar_lea.vmem %s26, %s870
      %p872 = scmp.lt.s32.totalorder %s38, 1
      %s873 = scalar_select %p872, %s38, 1
      %s874 = smul.addr %s873, 2
      %s875 = smul.addr %s874, 8
      %s876 = scalar_lea.vmem %s0, %s875
      %p877 = scmp.lt.s32.totalorder %s38, 1
      %s878 = scalar_select %p877, %s38, 1
      %s879 = smul.addr %s878, 2
      %s880 = smul.addr %s879, 8
      %s881 = scalar_lea.vmem %s1, %s880
      %p882 = scmp.lt.s32.totalorder %s38, 1
      %s883 = scalar_select %p882, %s38, 1
      %s884 = smul.addr %s883, 2
      %s885 = smul.addr %s884, 8
      %s886 = scalar_lea.vmem %s2, %s885
      %p887 = scmp.lt.s32.totalorder %s38, 1
      %s888 = scalar_select %p887, %s38, 1
      %s889 = smul.addr %s888, 2
      %s890 = smul.addr %s889, 8
      %s891 = scalar_lea.vmem %s3, %s890
      %p892 = scmp.lt.s32.totalorder %s38, 1
      %s893 = scalar_select %p892, %s38, 1
      %s894 = smul.addr %s893, 2
      %s895 = smul.addr %s894, 8
      %s896 = scalar_lea.vmem %s4, %s895
      %p897 = scmp.lt.s32.totalorder %s38, 1
      %s898 = scalar_select %p897, %s38, 1
      %s899 = smul.addr %s898, 2
      %s900 = smul.addr %s899, 8
      %s901 = scalar_lea.vmem %s5, %s900
      %p902 = scmp.lt.s32.totalorder %s38, 1
      %s903 = scalar_select %p902, %s38, 1
      %s904 = smul.addr %s903, 2
      %s905 = smul.addr %s904, 8
      %s906 = scalar_lea.vmem %s24, %s905
      %p907 = scmp.lt.s32.totalorder %s38, 1
      %s908 = scalar_select %p907, %s38, 1
      %s909 = smul.addr %s908, 2
      %s910 = smul.addr %s909, 8
      %s911 = scalar_lea.vmem %s25, %s910
      %p912 = scmp.lt.s32.totalorder %s38, 1
      %s913 = scalar_select %p912, %s38, 1
      %s914 = smul.addr %s913, 2
      %s915 = smul.addr %s914, 8
      %s916 = scalar_lea.vmem %s26, %s915
      %v917 = vld [vmem:[%s876] sm:$0xff]
      %v918 = vld [vmem:[%s876 + $0x8] sm:$0x3]
      %v919 = vld [vmem:[%s881] sm:$0xff]
      %v920 = vld [vmem:[%s881 + $0x8] sm:$0x3]
      %v921 = vld [vmem:[%s886] sm:$0xff]
      %v922 = vld [vmem:[%s886 + $0x8] sm:$0x3]
      %v923 = vld [vmem:[%s891] sm:$0xff]
      %v924 = vld [vmem:[%s891 + $0x8] sm:$0x3]
      %v925 = vld [vmem:[%s896] sm:$0xff]
      %v926 = vld [vmem:[%s896 + $0x8] sm:$0x3]
      %v927 = vld [vmem:[%s901] sm:$0xff]
      %v928 = vld [vmem:[%s901 + $0x8] sm:$0x3]
      %931 = vrot.lane.b32.xlu0 %v919, 32
      %v932 = vpop.permute.xlu0 %931
      %933 = vrot.lane.b32.xlu0 %v920, 32
      %v934 = vpop.permute.xlu0 %933
      %vm937 = vcmask 261120
      %v938 = vsel %vm937, %v917, %v932
      %v939 = vsel %vm937, %v918, %v934
      %v940 = vld [vmem:[%s6] sm:$0xff]
      %v941 = vld [vmem:[%s6 + $0x8] sm:$0xff]
      %v942 = vld [vmem:[%s6 + $0x10] sm:$0xff]
      %v943 = vld [vmem:[%s6 + $0x18] sm:$0xff]
      %v944 = vld [vmem:[%s6 + $0x20] sm:$0xff]
      %v945 = vld [vmem:[%s6 + $0x28] sm:$0xff]
      %v946 = vld [vmem:[%s6 + $0x30] sm:$0xff]
      %v947 = vld [vmem:[%s6 + $0x38] sm:$0xff]
      %v948 = vld [vmem:[%s7] sm:$0x1]
      %v950 = vperm.slane %v948, 0
      %vm952 = vcmask 523264
      %v954 = vsel %vm952, %v938, 0
      %v957 = vsel %vm952, %v939, 0
      %959 = vmatpush.msra.mxu0 0.0
      %960 = vmatpush.msra.mxu0 0.0
      %961 = vmatpush.msra.mxu0 0.0
      %962 = vmatpush.msra.mxu0 0.0
      %963 = vmatpush.msra.mxu0 0.0
      %964 = vmatpush.msra.mxu0 0.0
      %965 = vmatpush.msra.mxu0 0.0
      %966 = vmatpush.msra.mxu0 0.0
      %967 = vmatpush.msra.mxu0 %v947
      %968 = vmatpush.msra.mxu0 %v946
      %969 = vmatpush.msra.mxu0 %v945
      %970 = vmatpush.msra.mxu0 %v944
      %971 = vmatpush.msra.mxu0 %v943
      %972 = vmatpush.msra.mxu0 %v942
      %973 = vmatpush.msra.mxu0 %v941
      %974 = vmatpush.msra.mxu0 %v940
      %975 = vmatmul.f32.gmra.mxu0 %v954
      %v976 = vpop.f32.mrf.mxu0
      %v977 = vadd.f32 %v950, %v976
      %978 = vmatmul.f32.gmra.mxu0 %v957
      %v979 = vpop.f32.mrf.mxu0
      %v980 = vadd.f32 %v950, %v979
      %981 = vdwg.mxu0
      %v982 = vmax.f32 %v977, 0.0
      %v983 = vmax.f32 %v980, 0.0
      %986 = vrot.lane.b32.xlu0 %v982, 32
      %v987 = vpop.permute.xlu0 %986
      %988 = vrot.lane.b32.xlu0 %v983, 32
      %v989 = vpop.permute.xlu0 %988
      %v992 = vsel %vm937, %v921, %v987
      %v993 = vsel %vm937, %v922, %v989
      %s994 = scalar_lea.vmem %s6, 64
      %v995 = vld [vmem:[%s994] sm:$0xff]
      %v996 = vld [vmem:[%s994 + $0x8] sm:$0xff]
      %v997 = vld [vmem:[%s994 + $0x10] sm:$0xff]
      %v998 = vld [vmem:[%s994 + $0x18] sm:$0xff]
      %v999 = vld [vmem:[%s994 + $0x20] sm:$0xff]
      %v1000 = vld [vmem:[%s994 + $0x28] sm:$0xff]
      %v1001 = vld [vmem:[%s994 + $0x30] sm:$0xff]
      %v1002 = vld [vmem:[%s994 + $0x38] sm:$0xff]
      %s1003 = scalar_lea.vmem %s7, 1
      %v1004 = vld [vmem:[%s1003] sm:$0x1]
      %v1006 = vperm.slane %v1004, 0
      %v1009 = vsel %vm952, %v992, 0
      %v1012 = vsel %vm952, %v993, 0
      %1014 = vmatpush.msra.mxu0 0.0
      %1015 = vmatpush.msra.mxu0 0.0
      %1016 = vmatpush.msra.mxu0 0.0
      %1017 = vmatpush.msra.mxu0 0.0
      %1018 = vmatpush.msra.mxu0 0.0
      %1019 = vmatpush.msra.mxu0 0.0
      %1020 = vmatpush.msra.mxu0 0.0
      %1021 = vmatpush.msra.mxu0 0.0
      %1022 = vmatpush.msra.mxu0 %v1002
      %1023 = vmatpush.msra.mxu0 %v1001
      %1024 = vmatpush.msra.mxu0 %v1000
      %1025 = vmatpush.msra.mxu0 %v999
      %1026 = vmatpush.msra.mxu0 %v998
      %1027 = vmatpush.msra.mxu0 %v997
      %1028 = vmatpush.msra.mxu0 %v996
      %1029 = vmatpush.msra.mxu0 %v995
      %1030 = vmatmul.f32.gmra.mxu0 %v1009
      %v1031 = vpop.f32.mrf.mxu0
      %v1032 = vadd.f32 %v1006, %v1031
      %1033 = vmatmul.f32.gmra.mxu0 %v1012
      %v1034 = vpop.f32.mrf.mxu0
      %v1035 = vadd.f32 %v1006, %v1034
      %1036 = vdwg.mxu0
      %v1037 = vmax.f32 %v1032, 0.0
      %v1038 = vmax.f32 %v1035, 0.0
      %1041 = vrot.lane.b32.xlu0 %v1037, 32
      %v1042 = vpop.permute.xlu0 %1041
      %1043 = vrot.lane.b32.xlu0 %v1038, 32
      %v1044 = vpop.permute.xlu0 %1043
      %v1047 = vsel %vm937, %v982, %v1042
      %v1048 = vsel %vm937, %v983, %v1044
      %v1049 = vld [vmem:[%s8] sm:$0xff]
      %v1050 = vld [vmem:[%s8 + $0x8] sm:$0xff]
      %v1051 = vld [vmem:[%s8 + $0x10] sm:$0xff]
      %v1052 = vld [vmem:[%s8 + $0x18] sm:$0xff]
      %v1053 = vld [vmem:[%s8 + $0x20] sm:$0xff]
      %v1054 = vld [vmem:[%s8 + $0x28] sm:$0xff]
      %v1055 = vld [vmem:[%s8 + $0x30] sm:$0xff]
      %v1056 = vld [vmem:[%s8 + $0x38] sm:$0xff]
      %v1057 = vld [vmem:[%s9] sm:$0x1]
      %v1059 = vperm.slane %v1057, 0
      %v1062 = vsel %vm952, %v1047, 0
      %v1065 = vsel %vm952, %v1048, 0
      %1067 = vmatpush.msra.mxu0 0.0
      %1068 = vmatpush.msra.mxu0 0.0
      %1069 = vmatpush.msra.mxu0 0.0
      %1070 = vmatpush.msra.mxu0 0.0
      %1071 = vmatpush.msra.mxu0 0.0
      %1072 = vmatpush.msra.mxu0 0.0
      %1073 = vmatpush.msra.mxu0 0.0
      %1074 = vmatpush.msra.mxu0 0.0
      %1075 = vmatpush.msra.mxu0 %v1056
      %1076 = vmatpush.msra.mxu0 %v1055
      %1077 = vmatpush.msra.mxu0 %v1054
      %1078 = vmatpush.msra.mxu0 %v1053
      %1079 = vmatpush.msra.mxu0 %v1052
      %1080 = vmatpush.msra.mxu0 %v1051
      %1081 = vmatpush.msra.mxu0 %v1050
      %1082 = vmatpush.msra.mxu0 %v1049
      %1083 = vmatmul.f32.gmra.mxu0 %v1062
      %v1084 = vpop.f32.mrf.mxu0
      %v1085 = vadd.f32 %v1059, %v1084
      %1086 = vmatmul.f32.gmra.mxu0 %v1065
      %v1087 = vpop.f32.mrf.mxu0
      %v1088 = vadd.f32 %v1059, %v1087
      %1089 = vdwg.mxu0
      %v1090 = vld [vmem:[%s10] sm:$0xff]
      %v1091 = vld [vmem:[%s10 + $0x8] sm:$0x3]
      %v1092 = vld [vmem:[%s11] sm:$0xff]
      %v1093 = vld [vmem:[%s11 + $0x8] sm:$0x3]
      %v1094 = vsel %vm937, %v1085, 0.0
      %vm1095 = vcmask 254976
      %v1096 = vsel %vm1095, %v1088, 0.0
      %v1097 = vadd.f32 %v1094, %v1096
      %1098 = vadd.xlane.f32.xlu0 %v1097
      %v1099 = vpop.xlane.xlu0 %1098
      %v1100 = vrot.slane %v1099, 4
      %v1101 = vadd.f32 %v1099, %v1100
      %v1102 = vrot.slane %v1101, 2
      %v1103 = vadd.f32 %v1101, %v1102
      %v1104 = vrot.slane %v1103, 1
      %v1105 = vadd.f32 %v1103, %v1104
      %v1106 = vrcp.pop 320.0
      %v1107 = vmul.f32 320.0, %v1106
      %v1108 = vsub.f32 1.0, %v1107
      %v1109 = vmul.f32 %v1106, %v1108
      %v1110 = vadd.f32 %v1106, %v1109
      %vm1111 = vweird.f32 %v1106
      %v1112 = vsel %vm1111, %v1106, %v1110
      %v1113 = vmul.f32 %v1105, %v1112
      %v1114 = vsub.f32 %v1085, %v1113
      %v1115 = vsub.f32 %v1088, %v1113
      %v1116 = vmul.f32 %v1114, %v1114
      %v1117 = vmul.f32 %v1115, %v1115
      %v1118 = vsel %vm937, %v1116, 0.0
      %v1119 = vsel %vm1095, %v1117, 0.0
      %v1120 = vadd.f32 %v1118, %v1119
      %1121 = vadd.xlane.f32.xlu0 %v1120
      %v1122 = vpop.xlane.xlu0 %1121
      %v1123 = vrot.slane %v1122, 4
      %v1124 = vadd.f32 %v1122, %v1123
      %v1125 = vrot.slane %v1124, 2
      %v1126 = vadd.f32 %v1124, %v1125
      %v1127 = vrot.slane %v1126, 1
      %v1128 = vadd.f32 %v1126, %v1127
      %v1129 = vmul.f32 %v1128, %v1112
      %v1130 = vadd.f32 %v1129, 1e-05
      %v1131 = vrsqrt.pop %v1130
      %v1132 = vmul.f32 %v1131, %v1130
      %v1133 = vmul.f32 %v1132, %v1131
      %v1134 = vmul.f32 0.5, %v1133
      %v1135 = vsub.f32 1.5, %v1134
      %v1136 = vmul.f32 %v1131, %v1135
      %vm1137 = vweird.f32 %v1130
      %vm1138 = vweird.f32 %v1131
      %vm1139 = vmor %vm1137, %vm1138
      %v1140 = vsel %vm1139, %v1131, %v1136
      %v1141 = vmul.f32 %v1114, %v1140
      %v1142 = vmul.f32 %v1115, %v1140
      %v1143 = vmul.f32 %v1141, %v1090
      %v1144 = vmul.f32 %v1142, %v1091
      %v1145 = vadd.f32 %v1143, %v1092
      %v1146 = vadd.f32 %v1144, %v1093
      %v1147 = vmax.f32 %v1145, 0.0
      %v1148 = vmax.f32 %v1146, 0.0
      %1149 = vst.msk [vmem:[%s906] sm:$0xff] %vm937, %v1147
      %1150 = vst.msk [vmem:[%s906 + $0x8] sm:$0x3] %vm1095, %v1148
      %1153 = vrot.lane.b32.xlu0 %v927, 32
      %v1154 = vpop.permute.xlu0 %1153
      %1155 = vrot.lane.b32.xlu0 %v928, 32
      %v1156 = vpop.permute.xlu0 %1155
      %v1159 = vsel %vm937, %v925, %v1154
      %v1160 = vsel %vm937, %v926, %v1156
      %v1161 = vld [vmem:[%s12] sm:$0xff]
      %v1162 = vld [vmem:[%s12 + $0x8] sm:$0xff]
      %v1163 = vld [vmem:[%s12 + $0x10] sm:$0xff]
      %v1164 = vld [vmem:[%s12 + $0x18] sm:$0xff]
      %v1165 = vld [vmem:[%s12 + $0x20] sm:$0xff]
      %v1166 = vld [vmem:[%s12 + $0x28] sm:$0xff]
      %v1167 = vld [vmem:[%s12 + $0x30] sm:$0xff]
      %v1168 = vld [vmem:[%s12 + $0x38] sm:$0xff]
      %v1169 = vld [vmem:[%s13] sm:$0x1]
      %v1171 = vperm.slane %v1169, 0
      %v1174 = vsel %vm952, %v1159, 0
      %v1177 = vsel %vm952, %v1160, 0
      %1179 = vmatpush.msra.mxu0 0.0
      %1180 = vmatpush.msra.mxu0 0.0
      %1181 = vmatpush.msra.mxu0 0.0
      %1182 = vmatpush.msra.mxu0 0.0
      %1183 = vmatpush.msra.mxu0 0.0
      %1184 = vmatpush.msra.mxu0 0.0
      %1185 = vmatpush.msra.mxu0 0.0
      %1186 = vmatpush.msra.mxu0 0.0
      %1187 = vmatpush.msra.mxu0 %v1168
      %1188 = vmatpush.msra.mxu0 %v1167
      %1189 = vmatpush.msra.mxu0 %v1166
      %1190 = vmatpush.msra.mxu0 %v1165
      %1191 = vmatpush.msra.mxu0 %v1164
      %1192 = vmatpush.msra.mxu0 %v1163
      %1193 = vmatpush.msra.mxu0 %v1162
      %1194 = vmatpush.msra.mxu0 %v1161
      %1195 = vmatmul.f32.gmra.mxu0 %v1174
      %v1196 = vpop.f32.mrf.mxu0
      %v1197 = vadd.f32 %v1171, %v1196
      %1198 = vmatmul.f32.gmra.mxu0 %v1177
      %v1199 = vpop.f32.mrf.mxu0
      %v1200 = vadd.f32 %v1171, %v1199
      %1201 = vdwg.mxu0
      %v1202 = vmax.f32 %v1197, 0.0
      %v1203 = vmax.f32 %v1200, 0.0
      %1206 = vrot.lane.b32.xlu0 %v1202, 32
      %v1207 = vpop.permute.xlu0 %1206
      %1208 = vrot.lane.b32.xlu0 %v1203, 32
      %v1209 = vpop.permute.xlu0 %1208
      %v1212 = vsel %vm937, %v923, %v1207
      %v1213 = vsel %vm937, %v924, %v1209
      %s1214 = scalar_lea.vmem %s12, 64
      %v1215 = vld [vmem:[%s1214] sm:$0xff]
      %v1216 = vld [vmem:[%s1214 + $0x8] sm:$0xff]
      %v1217 = vld [vmem:[%s1214 + $0x10] sm:$0xff]
      %v1218 = vld [vmem:[%s1214 + $0x18] sm:$0xff]
      %v1219 = vld [vmem:[%s1214 + $0x20] sm:$0xff]
      %v1220 = vld [vmem:[%s1214 + $0x28] sm:$0xff]
      %v1221 = vld [vmem:[%s1214 + $0x30] sm:$0xff]
      %v1222 = vld [vmem:[%s1214 + $0x38] sm:$0xff]
      %s1223 = scalar_lea.vmem %s13, 1
      %v1224 = vld [vmem:[%s1223] sm:$0x1]
      %v1226 = vperm.slane %v1224, 0
      %v1229 = vsel %vm952, %v1212, 0
      %v1232 = vsel %vm952, %v1213, 0
      %1234 = vmatpush.msra.mxu0 0.0
      %1235 = vmatpush.msra.mxu0 0.0
      %1236 = vmatpush.msra.mxu0 0.0
      %1237 = vmatpush.msra.mxu0 0.0
      %1238 = vmatpush.msra.mxu0 0.0
      %1239 = vmatpush.msra.mxu0 0.0
      %1240 = vmatpush.msra.mxu0 0.0
      %1241 = vmatpush.msra.mxu0 0.0
      %1242 = vmatpush.msra.mxu0 %v1222
      %1243 = vmatpush.msra.mxu0 %v1221
      %1244 = vmatpush.msra.mxu0 %v1220
      %1245 = vmatpush.msra.mxu0 %v1219
      %1246 = vmatpush.msra.mxu0 %v1218
      %1247 = vmatpush.msra.mxu0 %v1217
      %1248 = vmatpush.msra.mxu0 %v1216
      %1249 = vmatpush.msra.mxu0 %v1215
      %1250 = vmatmul.f32.gmra.mxu0 %v1229
      %v1251 = vpop.f32.mrf.mxu0
      %v1252 = vadd.f32 %v1226, %v1251
      %1253 = vmatmul.f32.gmra.mxu0 %v1232
      %v1254 = vpop.f32.mrf.mxu0
      %v1255 = vadd.f32 %v1226, %v1254
      %1256 = vdwg.mxu0
      %v1257 = vmax.f32 %v1252, 0.0
      %v1258 = vmax.f32 %v1255, 0.0
      %1261 = vrot.lane.b32.xlu0 %v1257, 32
      %v1262 = vpop.permute.xlu0 %1261
      %1263 = vrot.lane.b32.xlu0 %v1258, 32
      %v1264 = vpop.permute.xlu0 %1263
      %v1267 = vsel %vm937, %v1202, %v1262
      %v1268 = vsel %vm937, %v1203, %v1264
      %v1269 = vld [vmem:[%s14] sm:$0xff]
      %v1270 = vld [vmem:[%s14 + $0x8] sm:$0xff]
      %v1271 = vld [vmem:[%s14 + $0x10] sm:$0xff]
      %v1272 = vld [vmem:[%s14 + $0x18] sm:$0xff]
      %v1273 = vld [vmem:[%s14 + $0x20] sm:$0xff]
      %v1274 = vld [vmem:[%s14 + $0x28] sm:$0xff]
      %v1275 = vld [vmem:[%s14 + $0x30] sm:$0xff]
      %v1276 = vld [vmem:[%s14 + $0x38] sm:$0xff]
      %v1277 = vld [vmem:[%s15] sm:$0x1]
      %v1279 = vperm.slane %v1277, 0
      %v1282 = vsel %vm952, %v1267, 0
      %v1285 = vsel %vm952, %v1268, 0
      %1287 = vmatpush.msra.mxu0 0.0
      %1288 = vmatpush.msra.mxu0 0.0
      %1289 = vmatpush.msra.mxu0 0.0
      %1290 = vmatpush.msra.mxu0 0.0
      %1291 = vmatpush.msra.mxu0 0.0
      %1292 = vmatpush.msra.mxu0 0.0
      %1293 = vmatpush.msra.mxu0 0.0
      %1294 = vmatpush.msra.mxu0 0.0
      %1295 = vmatpush.msra.mxu0 %v1276
      %1296 = vmatpush.msra.mxu0 %v1275
      %1297 = vmatpush.msra.mxu0 %v1274
      %1298 = vmatpush.msra.mxu0 %v1273
      %1299 = vmatpush.msra.mxu0 %v1272
      %1300 = vmatpush.msra.mxu0 %v1271
      %1301 = vmatpush.msra.mxu0 %v1270
      %1302 = vmatpush.msra.mxu0 %v1269
      %1303 = vmatmul.f32.gmra.mxu0 %v1282
      %v1304 = vpop.f32.mrf.mxu0
      %v1305 = vadd.f32 %v1279, %v1304
      %1306 = vmatmul.f32.gmra.mxu0 %v1285
      %v1307 = vpop.f32.mrf.mxu0
      %v1308 = vadd.f32 %v1279, %v1307
      %1309 = vdwg.mxu0
      %v1310 = vld [vmem:[%s16] sm:$0xff]
      %v1311 = vld [vmem:[%s16 + $0x8] sm:$0x3]
      %v1312 = vld [vmem:[%s17] sm:$0xff]
      %v1313 = vld [vmem:[%s17 + $0x8] sm:$0x3]
      %v1314 = vsel %vm937, %v1305, 0.0
      %v1315 = vsel %vm1095, %v1308, 0.0
      %v1316 = vadd.f32 %v1314, %v1315
      %1317 = vadd.xlane.f32.xlu0 %v1316
      %v1318 = vpop.xlane.xlu0 %1317
      %v1319 = vrot.slane %v1318, 4
      %v1320 = vadd.f32 %v1318, %v1319
      %v1321 = vrot.slane %v1320, 2
      %v1322 = vadd.f32 %v1320, %v1321
      %v1323 = vrot.slane %v1322, 1
      %v1324 = vadd.f32 %v1322, %v1323
      %v1325 = vmul.f32 %v1324, %v1112
      %v1326 = vsub.f32 %v1305, %v1325
      %v1327 = vsub.f32 %v1308, %v1325
      %v1328 = vmul.f32 %v1326, %v1326
      %v1329 = vmul.f32 %v1327, %v1327
      %v1330 = vsel %vm937, %v1328, 0.0
      %v1331 = vsel %vm1095, %v1329, 0.0
      %v1332 = vadd.f32 %v1330, %v1331
      %1333 = vadd.xlane.f32.xlu0 %v1332
      %v1334 = vpop.xlane.xlu0 %1333
      %v1335 = vrot.slane %v1334, 4
      %v1336 = vadd.f32 %v1334, %v1335
      %v1337 = vrot.slane %v1336, 2
      %v1338 = vadd.f32 %v1336, %v1337
      %v1339 = vrot.slane %v1338, 1
      %v1340 = vadd.f32 %v1338, %v1339
      %v1341 = vmul.f32 %v1340, %v1112
      %v1342 = vadd.f32 %v1341, 1e-05
      %v1343 = vrsqrt.pop %v1342
      %v1344 = vmul.f32 %v1343, %v1342
      %v1345 = vmul.f32 %v1344, %v1343
      %v1346 = vmul.f32 0.5, %v1345
      %v1347 = vsub.f32 1.5, %v1346
      %v1348 = vmul.f32 %v1343, %v1347
      %vm1349 = vweird.f32 %v1342
      %vm1350 = vweird.f32 %v1343
      %vm1351 = vmor %vm1349, %vm1350
      %v1352 = vsel %vm1351, %v1343, %v1348
      %v1353 = vmul.f32 %v1326, %v1352
      %v1354 = vmul.f32 %v1327, %v1352
      %v1355 = vmul.f32 %v1353, %v1310
      %v1356 = vmul.f32 %v1354, %v1311
      %v1357 = vadd.f32 %v1355, %v1312
      %v1358 = vadd.f32 %v1356, %v1313
      %v1359 = vmax.f32 %v1357, 0.0
      %v1360 = vmax.f32 %v1358, 0.0
      %1361 = vst.msk [vmem:[%s911] sm:$0xff] %vm937, %v1359
      %1362 = vst.msk [vmem:[%s911 + $0x8] sm:$0x3] %vm1095, %v1360
      %v1363 = vld [vmem:[%s18] sm:$0xff]
      %v1364 = vld [vmem:[%s18 + $0x8] sm:$0xff]
      %v1365 = vld [vmem:[%s18 + $0x10] sm:$0xff]
      %v1366 = vld [vmem:[%s18 + $0x18] sm:$0xff]
      %v1367 = vld [vmem:[%s18 + $0x20] sm:$0xff]
      %v1368 = vld [vmem:[%s18 + $0x28] sm:$0xff]
      %v1369 = vld [vmem:[%s18 + $0x30] sm:$0xff]
      %v1370 = vld [vmem:[%s18 + $0x38] sm:$0xff]
      %v1371 = vld [vmem:[%s19] sm:$0x1]
      %1374 = vrot.lane.b32.xlu0 %v925, 32
      %v1375 = vpop.permute.xlu0 %1374
      %1376 = vrot.lane.b32.xlu0 %v926, 32
      %v1377 = vpop.permute.xlu0 %1376
      %v1380 = vsel %vm937, %v917, %v1375
      %v1381 = vsel %vm937, %v918, %v1377
      %v1383 = vperm.slane %v1371, 0
      %v1386 = vsel %vm952, %v1380, 0
      %v1389 = vsel %vm952, %v1381, 0
      %1391 = vmatpush.msra.mxu0 0.0
      %1392 = vmatpush.msra.mxu0 0.0
      %1393 = vmatpush.msra.mxu0 0.0
      %1394 = vmatpush.msra.mxu0 0.0
      %1395 = vmatpush.msra.mxu0 0.0
      %1396 = vmatpush.msra.mxu0 0.0
      %1397 = vmatpush.msra.mxu0 0.0
      %1398 = vmatpush.msra.mxu0 0.0
      %1399 = vmatpush.msra.mxu0 %v1370
      %1400 = vmatpush.msra.mxu0 %v1369
      %1401 = vmatpush.msra.mxu0 %v1368
      %1402 = vmatpush.msra.mxu0 %v1367
      %1403 = vmatpush.msra.mxu0 %v1366
      %1404 = vmatpush.msra.mxu0 %v1365
      %1405 = vmatpush.msra.mxu0 %v1364
      %1406 = vmatpush.msra.mxu0 %v1363
      %1407 = vmatmul.f32.gmra.mxu0 %v1386
      %v1408 = vpop.f32.mrf.mxu0
      %v1409 = vadd.f32 %v1383, %v1408
      %1410 = vmatmul.f32.gmra.mxu0 %v1389
      %v1411 = vpop.f32.mrf.mxu0
      %v1412 = vadd.f32 %v1383, %v1411
      %1413 = vdwg.mxu0
      %v1414 = vmax.f32 %v1409, 0.0
      %v1415 = vmax.f32 %v1412, 0.0
      %v1416 = vrot.slane %v925, 1
      %1417 = vrot.lane.b32.xlu0 %v1416, 32
      %v1418 = vpop.permute.xlu0 %1417
      %v1420 = vsel %vm937, %v917, %v1418
      %v1422 = vrot.slane %v1420, 2
      %v1423 = vsel %vm952, %v1422, 0
      %1425 = vmatpush.msra.mxu0 0.0
      %1426 = vmatpush.msra.mxu0 0.0
      %1427 = vmatpush.msra.mxu0 0.0
      %1428 = vmatpush.msra.mxu0 0.0
      %1429 = vmatpush.msra.mxu0 0.0
      %1430 = vmatpush.msra.mxu0 0.0
      %1431 = vmatpush.msra.mxu0 0.0
      %1432 = vmatpush.msra.mxu0 0.0
      %1433 = vmatpush.msra.mxu0 %v1370
      %1434 = vmatpush.msra.mxu0 %v1369
      %1435 = vmatpush.msra.mxu0 %v1368
      %1436 = vmatpush.msra.mxu0 %v1367
      %1437 = vmatpush.msra.mxu0 %v1366
      %1438 = vmatpush.msra.mxu0 %v1365
      %1439 = vmatpush.msra.mxu0 %v1364
      %1440 = vmatpush.msra.mxu0 %v1363
      %1441 = vmatmul.f32.gmra.mxu0 %v1423
      %v1442 = vpop.f32.mrf.mxu0
      %v1443 = vadd.f32 %v1383, %v1442
      %1444 = vdwg.mxu0
      %v1445 = vmax.f32 %v1443, 0.0
      %v1446 = vmul.f32 %v1445, 0.75
      %v1447 = vmul.f32 %v1445, 0.25
      %v1449 = vrot.slane %v1447, 1
      %v1451 = vadd.f32 %v1446, %v1449
      %v1453 = vrot.slane %v1446, 1
      %v1455 = vadd.f32 %v1447, %v1453
      %v1457 = vrot.slane %v1451, 7
      %v1460 = vrot.slane %v1455, 6
      %v1462 = vrot.slane %v1451, 6
      %v1464 = vrot.slane %v1455, 5
      %v1466 = vrot.slane %v1451, 5
      %v1468 = vrot.slane %v1455, 4
      %v1470 = vrot.slane %v1451, 4
      %v1472 = vrot.slane %v1455, 3
      %v1475 = vrot.slane %v1445, 3
      %vm1477 = vcmask 1040384
      %v1478 = vsel %vm1477, %v1445, %v1457
      %vm1479 = vcmask 1041408
      %v1480 = vsel %vm1479, %v1478, %v1460
      %vm1481 = vcmask 1042432
      %v1482 = vsel %vm1481, %v1480, %v1462
      %vm1483 = vcmask 1043456
      %v1484 = vsel %vm1483, %v1482, %v1464
      %vm1485 = vcmask 1044480
      %v1486 = vsel %vm1485, %v1484, %v1466
      %vm1487 = vcmask 1045504
      %v1488 = vsel %vm1487, %v1486, %v1468
      %vm1489 = vcmask 1046528
      %v1490 = vsel %vm1489, %v1488, %v1470
      %v1491 = vsel %vm1477, %v1472, %v1475
      %v1492 = vadd.f32 %v1414, %v1490
      %v1493 = vadd.f32 %v1415, %v1491
      %s1494 = scalar_lea.vmem %s18, 64
      %v1495 = vld [vmem:[%s1494] sm:$0xff]
      %v1496 = vld [vmem:[%s1494 + $0x8] sm:$0xff]
      %v1497 = vld [vmem:[%s1494 + $0x10] sm:$0xff]
      %v1498 = vld [vmem:[%s1494 + $0x18] sm:$0xff]
      %v1499 = vld [vmem:[%s1494 + $0x20] sm:$0xff]
      %v1500 = vld [vmem:[%s1494 + $0x28] sm:$0xff]
      %v1501 = vld [vmem:[%s1494 + $0x30] sm:$0xff]
      %v1502 = vld [vmem:[%s1494 + $0x38] sm:$0xff]
      %s1503 = scalar_lea.vmem %s19, 1
      %v1504 = vld [vmem:[%s1503] sm:$0x1]
      %1507 = vrot.lane.b32.xlu0 %v1492, 32
      %v1508 = vpop.permute.xlu0 %1507
      %1509 = vrot.lane.b32.xlu0 %v1493, 32
      %v1510 = vpop.permute.xlu0 %1509
      %v1513 = vsel %vm937, %v921, %v1508
      %v1514 = vsel %vm937, %v922, %v1510
      %v1516 = vperm.slane %v1504, 0
      %v1519 = vsel %vm952, %v1513, 0
      %v1522 = vsel %vm952, %v1514, 0
      %1524 = vmatpush.msra.mxu0 0.0
      %1525 = vmatpush.msra.mxu0 0.0
      %1526 = vmatpush.msra.mxu0 0.0
      %1527 = vmatpush.msra.mxu0 0.0
      %1528 = vmatpush.msra.mxu0 0.0
      %1529 = vmatpush.msra.mxu0 0.0
      %1530 = vmatpush.msra.mxu0 0.0
      %1531 = vmatpush.msra.mxu0 0.0
      %1532 = vmatpush.msra.mxu0 %v1502
      %1533 = vmatpush.msra.mxu0 %v1501
      %1534 = vmatpush.msra.mxu0 %v1500
      %1535 = vmatpush.msra.mxu0 %v1499
      %1536 = vmatpush.msra.mxu0 %v1498
      %1537 = vmatpush.msra.mxu0 %v1497
      %1538 = vmatpush.msra.mxu0 %v1496
      %1539 = vmatpush.msra.mxu0 %v1495
      %1540 = vmatmul.f32.gmra.mxu0 %v1519
      %v1541 = vpop.f32.mrf.mxu0
      %v1542 = vadd.f32 %v1516, %v1541
      %1543 = vmatmul.f32.gmra.mxu0 %v1522
      %v1544 = vpop.f32.mrf.mxu0
      %v1545 = vadd.f32 %v1516, %v1544
      %1546 = vdwg.mxu0
      %v1547 = vmax.f32 %v1542, 0.0
      %v1548 = vmax.f32 %v1545, 0.0
      %v1549 = vrot.slane %v1492, 3
      %v1550 = vrot.slane %v1493, 3
      %v1551 = vsel %vm1485, %v1549, %v1550
      %1552 = vrot.lane.b32.xlu0 %v1551, 32
      %v1553 = vpop.permute.xlu0 %1552
      %v1555 = vsel %vm937, %v921, %v1553
      %v1557 = vsel %vm952, %v1555, 0
      %1559 = vmatpush.msra.mxu0 0.0
      %1560 = vmatpush.msra.mxu0 0.0
      %1561 = vmatpush.msra.mxu0 0.0
      %1562 = vmatpush.msra.mxu0 0.0
      %1563 = vmatpush.msra.mxu0 0.0
      %1564 = vmatpush.msra.mxu0 0.0
      %1565 = vmatpush.msra.mxu0 0.0
      %1566 = vmatpush.msra.mxu0 0.0
      %1567 = vmatpush.msra.mxu0 %v1502
      %1568 = vmatpush.msra.mxu0 %v1501
      %1569 = vmatpush.msra.mxu0 %v1500
      %1570 = vmatpush.msra.mxu0 %v1499
      %1571 = vmatpush.msra.mxu0 %v1498
      %1572 = vmatpush.msra.mxu0 %v1497
      %1573 = vmatpush.msra.mxu0 %v1496
      %1574 = vmatpush.msra.mxu0 %v1495
      %1575 = vmatmul.f32.gmra.mxu0 %v1557
      %v1576 = vpop.f32.mrf.mxu0
      %v1577 = vadd.f32 %v1516, %v1576
      %1578 = vdwg.mxu0
      %v1579 = vmax.f32 %v1577, 0.0
      %v1580 = vmul.f32 %v1579, 0.45
      %v1581 = vmul.f32 %v1579, 0.55
      %v1583 = vrot.slane %v1581, 1
      %v1585 = vadd.f32 %v1580, %v1583
      %v1586 = vmul.f32 %v1579, 0.75
      %v1587 = vmul.f32 %v1579, 0.25
      %v1589 = vrot.slane %v1587, 1
      %v1591 = vadd.f32 %v1586, %v1589
      %v1592 = vmul.f32 %v1579, 0.05
      %v1593 = vmul.f32 %v1579, 0.95
      %v1595 = vrot.slane %v1593, 1
      %v1597 = vadd.f32 %v1592, %v1595
      %v1598 = vmul.f32 %v1579, 0.35
      %v1599 = vmul.f32 %v1579, 0.65
      %v1601 = vrot.slane %v1599, 1
      %v1603 = vadd.f32 %v1598, %v1601
      %v1605 = vrot.slane %v1598, 1
      %v1607 = vadd.f32 %v1599, %v1605
      %v1609 = vrot.slane %v1592, 1
      %v1611 = vadd.f32 %v1593, %v1609
      %v1613 = vrot.slane %v1586, 1
      %v1615 = vadd.f32 %v1587, %v1613
      %v1617 = vrot.slane %v1580, 1
      %v1619 = vadd.f32 %v1581, %v1617
      %v1621 = vrot.slane %v1585, 7
      %v1624 = vrot.slane %v1591, 7
      %v1627 = vrot.slane %v1597, 6
      %v1630 = vrot.slane %v1603, 6
      %v1633 = vrot.slane %v1607, 6
      %v1636 = vrot.slane %v1611, 6
      %v1639 = vrot.slane %v1615, 5
      %v1642 = vrot.slane %v1619, 5
      %v1645 = vrot.slane %v1579, 5
      %v1647 = vsel %vm1477, %v1579, %v1621
      %v1648 = vsel %vm1479, %v1647, %v1624
      %v1649 = vsel %vm1481, %v1648, %v1627
      %v1650 = vsel %vm1483, %v1649, %v1630
      %v1651 = vsel %vm1485, %v1650, %v1633
      %v1652 = vsel %vm1487, %v1651, %v1636
      %v1653 = vsel %vm1489, %v1652, %v1639
      %v1654 = vsel %vm1477, %v1642, %v1645
      %v1655 = vadd.f32 %v1547, %v1653
      %v1656 = vadd.f32 %v1548, %v1654
      %1659 = vrot.lane.b32.xlu0 %v1655, 32
      %v1660 = vpop.permute.xlu0 %1659
      %1661 = vrot.lane.b32.xlu0 %v1656, 32
      %v1662 = vpop.permute.xlu0 %1661
      %v1665 = vsel %vm937, %v1492, %v1660
      %v1666 = vsel %vm937, %v1493, %v1662
      %v1667 = vld [vmem:[%s20] sm:$0xff]
      %v1668 = vld [vmem:[%s20 + $0x8] sm:$0xff]
      %v1669 = vld [vmem:[%s20 + $0x10] sm:$0xff]
      %v1670 = vld [vmem:[%s20 + $0x18] sm:$0xff]
      %v1671 = vld [vmem:[%s20 + $0x20] sm:$0xff]
      %v1672 = vld [vmem:[%s20 + $0x28] sm:$0xff]
      %v1673 = vld [vmem:[%s20 + $0x30] sm:$0xff]
      %v1674 = vld [vmem:[%s20 + $0x38] sm:$0xff]
      %v1675 = vld [vmem:[%s21] sm:$0x1]
      %v1677 = vperm.slane %v1675, 0
      %v1680 = vsel %vm952, %v1665, 0
      %v1683 = vsel %vm952, %v1666, 0
      %1685 = vmatpush.msra.mxu0 0.0
      %1686 = vmatpush.msra.mxu0 0.0
      %1687 = vmatpush.msra.mxu0 0.0
      %1688 = vmatpush.msra.mxu0 0.0
      %1689 = vmatpush.msra.mxu0 0.0
      %1690 = vmatpush.msra.mxu0 0.0
      %1691 = vmatpush.msra.mxu0 0.0
      %1692 = vmatpush.msra.mxu0 0.0
      %1693 = vmatpush.msra.mxu0 %v1674
      %1694 = vmatpush.msra.mxu0 %v1673
      %1695 = vmatpush.msra.mxu0 %v1672
      %1696 = vmatpush.msra.mxu0 %v1671
      %1697 = vmatpush.msra.mxu0 %v1670
      %1698 = vmatpush.msra.mxu0 %v1669
      %1699 = vmatpush.msra.mxu0 %v1668
      %1700 = vmatpush.msra.mxu0 %v1667
      %1701 = vmatmul.f32.gmra.mxu0 %v1680
      %v1702 = vpop.f32.mrf.mxu0
      %v1703 = vadd.f32 %v1677, %v1702
      %1704 = vmatmul.f32.gmra.mxu0 %v1683
      %v1705 = vpop.f32.mrf.mxu0
      %v1706 = vadd.f32 %v1677, %v1705
      %1707 = vdwg.mxu0
      %v1708 = vld [vmem:[%s22] sm:$0xff]
      %v1709 = vld [vmem:[%s22 + $0x8] sm:$0x3]
      %v1710 = vld [vmem:[%s23] sm:$0xff]
      %v1711 = vld [vmem:[%s23 + $0x8] sm:$0x3]
      %v1712 = vsel %vm937, %v1703, 0.0
      %v1713 = vsel %vm1095, %v1706, 0.0
      %v1714 = vadd.f32 %v1712, %v1713
      %1715 = vadd.xlane.f32.xlu0 %v1714
      %v1716 = vpop.xlane.xlu0 %1715
      %v1717 = vrot.slane %v1716, 4
      %v1718 = vadd.f32 %v1716, %v1717
      %v1719 = vrot.slane %v1718, 2
      %v1720 = vadd.f32 %v1718, %v1719
      %v1721 = vrot.slane %v1720, 1
      %v1722 = vadd.f32 %v1720, %v1721
      %v1723 = vmul.f32 %v1722, %v1112
      %v1724 = vsub.f32 %v1703, %v1723
      %v1725 = vsub.f32 %v1706, %v1723
      %v1726 = vmul.f32 %v1724, %v1724
      %v1727 = vmul.f32 %v1725, %v1725
      %v1728 = vsel %vm937, %v1726, 0.0
      %v1729 = vsel %vm1095, %v1727, 0.0
      %v1730 = vadd.f32 %v1728, %v1729
      %1731 = vadd.xlane.f32.xlu0 %v1730
      %v1732 = vpop.xlane.xlu0 %1731
      %v1733 = vrot.slane %v1732, 4
      %v1734 = vadd.f32 %v1732, %v1733
      %v1735 = vrot.slane %v1734, 2
      %v1736 = vadd.f32 %v1734, %v1735
      %v1737 = vrot.slane %v1736, 1
      %v1738 = vadd.f32 %v1736, %v1737
      %v1739 = vmul.f32 %v1738, %v1112
      %v1740 = vadd.f32 %v1739, 1e-05
      %v1741 = vrsqrt.pop %v1740
      %v1742 = vmul.f32 %v1741, %v1740
      %v1743 = vmul.f32 %v1742, %v1741
      %v1744 = vmul.f32 0.5, %v1743
      %v1745 = vsub.f32 1.5, %v1744
      %v1746 = vmul.f32 %v1741, %v1745
      %vm1747 = vweird.f32 %v1740
      %vm1748 = vweird.f32 %v1741
      %vm1749 = vmor %vm1747, %vm1748
      %v1750 = vsel %vm1749, %v1741, %v1746
      %v1751 = vmul.f32 %v1724, %v1750
      %v1752 = vmul.f32 %v1725, %v1750
      %v1753 = vmul.f32 %v1751, %v1708
      %v1754 = vmul.f32 %v1752, %v1709
      %v1755 = vadd.f32 %v1753, %v1710
      %v1756 = vadd.f32 %v1754, %v1711
      %v1757 = vmax.f32 %v1755, 0.0
      %v1758 = vmax.f32 %v1756, 0.0
      %1759 = vst.msk [vmem:[%s916] sm:$0xff] %vm937, %v1757
      %1760 = vst.msk [vmem:[%s916 + $0x8] sm:$0x3] %vm1095, %v1758
      %p1761 = scmp.lt.s32.totalorder %s38, 1
      %s1762 = scalar_select %p1761, %s38, 1
      %s1763 = smul.addr %s1762, 2
      %s1764 = smul.addr %s1763, 8
      %s1765 = scalar_lea.vmem %s24, %s1764
      %p1766 = scmp.lt.s32.totalorder %s38, 1
      %s1767 = scalar_select %p1766, %s38, 1
      %s1768 = smul.addr %s1767, 2
      %s1769 = smul.addr %s1768, 8
      %s1770 = scalar_lea.vmem %s25, %s1769
      %p1771 = scmp.lt.s32.totalorder %s38, 1
      %s1772 = scalar_select %p1771, %s38, 1
      %s1773 = smul.addr %s1772, 2
      %s1774 = smul.addr %s1773, 8
      %s1775 = scalar_lea.vmem %s26, %s1774
      // Predicated region
      $region117: #{tpu_custom_call.1} parent=115 // pred_check
        %p1776 = pneg %p590
      $region118: #{tpu_custom_call.1} parent=115 // pred_check_branch
        %1778 = sbr.rel (%p1776) target = $region120
      $region119: #{tpu_custom_call.1} parent=115 // pred_region
        _
      $region120: #{tpu_custom_call.1} parent=115 // pred_fallthru
        _
      // Predicated region
      $region121: #{tpu_custom_call.1} parent=115 // pred_check
        %p1779 = pneg %p616
      $region122: #{tpu_custom_call.1} parent=115 // pred_check_branch
        %1781 = sbr.rel (%p1779) target = $region124
      $region123: #{tpu_custom_call.1} parent=115 // pred_region
        _
      $region124: #{tpu_custom_call.1} parent=115 // pred_fallthru
        _
      // Predicated region
      $region125: #{tpu_custom_call.1} parent=115 // pred_check
        %p1782 = pneg %p642
      $region126: #{tpu_custom_call.1} parent=115 // pred_check_branch
        %1784 = sbr.rel (%p1782) target = $region128
      $region127: #{tpu_custom_call.1} parent=115 // pred_region
        _
      $region128: #{tpu_custom_call.1} parent=115 // pred_fallthru
        _
    $region116: #{tpu_custom_call.1} parent=5 // pred_fallthru
      _
    %p1785 = scmp.le.s32.totalorder 2, %s33
    // Predicated region
    $region129: #{tpu_custom_call.1} parent=5 // pred_check
      %p1786 = pneg %p1785
    $region130: #{tpu_custom_call.1} parent=5 // pred_check_branch
      %1788 = sbr.rel (%p1786) target = $region132
    $region131: #{tpu_custom_call.1} parent=5 // pred_region
      %s1789 = ssub.s32 %s33, 2
      // Predicated region
      $region133: #{tpu_custom_call.1} parent=131 // pred_check
        %p1790 = pneg %p596
      $region134: #{tpu_custom_call.1} parent=131 // pred_check_branch
        %1792 = sbr.rel (%p1790) target = $region136
      $region135: #{tpu_custom_call.1} parent=131 // pred_region
        %p1793 = scmp.lt.s32.totalorder %s39, 1
        %s1794 = scalar_select %p1793, %s39, 1
        %s1795 = smul.addr %s1794, 2
        %s1796 = smul.addr %s1795, 8
        %s1797 = scalar_lea.vmem %s24, %s1796
      $region136: #{tpu_custom_call.1} parent=131 // pred_fallthru
        _
      // Predicated region
      $region137: #{tpu_custom_call.1} parent=131 // pred_check
        %p1798 = pneg %p622
      $region138: #{tpu_custom_call.1} parent=131 // pred_check_branch
        %1800 = sbr.rel (%p1798) target = $region140
      $region139: #{tpu_custom_call.1} parent=131 // pred_region
        %p1801 = scmp.lt.s32.totalorder %s39, 1
        %s1802 = scalar_select %p1801, %s39, 1
        %s1803 = smul.addr %s1802, 2
        %s1804 = smul.addr %s1803, 8
        %s1805 = scalar_lea.vmem %s25, %s1804
      $region140: #{tpu_custom_call.1} parent=131 // pred_fallthru
        _
      // Predicated region
      $region141: #{tpu_custom_call.1} parent=131 // pred_check
        %p1806 = pneg %p648
      $region142: #{tpu_custom_call.1} parent=131 // pred_check_branch
        %1808 = sbr.rel (%p1806) target = $region144
      $region143: #{tpu_custom_call.1} parent=131 // pred_region
        %p1809 = scmp.lt.s32.totalorder %s39, 1
        %s1810 = scalar_select %p1809, %s39, 1
        %s1811 = smul.addr %s1810, 2
        %s1812 = smul.addr %s1811, 8
        %s1813 = scalar_lea.vmem %s26, %s1812
      $region144: #{tpu_custom_call.1} parent=131 // pred_fallthru
        _
    $region132: #{tpu_custom_call.1} parent=5 // pred_fallthru
      _
  $region6: #{tpu_custom_call.1} parent=0 // loop_footer
    %s37 = sadd.s32 1, %s33
  $region7: #{tpu_custom_call.1} parent=0 // loop_footer_branch
    %32 = sbr.rel target = $region3
  $region8: #{tpu_custom_call.1} parent=0 // loop_exit
    _

</llo_original>
